<compile_context>
chip_gen: v5e
topology: v5e:2x2
jax: 0.10.0
libtpu: 0.0.40
codegen_flags: <defaults>
</compile_context>

<pallas_src>
import functools

import jax
import jax.numpy as jnp
import numpy as np
from jax.experimental import pallas as pl
from jax.experimental.pallas import tpu as pltpu


# ----------------------------------------------------------------------------
# VMEM / channel-block planning
# ----------------------------------------------------------------------------

def _vmem_limit_bytes():
    """Generation-aware scoped-VMEM limit (~75% of physical per TensorCore)."""
    try:
        cap = int(pltpu.get_tpu_info().vmem_capacity_bytes)
    except Exception:
        cap = 64 * 1024 * 1024          # conservative fallback (v7x-sized)
    return (cap * 3) // 4               # v5e/v6e 128MiB->96MiB, v7x 64MiB->48MiB


def _plan_channel_blocking(C, H, W, PH, PW, itemsize, vmem_limit):
    """Returns (C_padded, CB, feature_buffer_count)."""
    usable = (vmem_limit * 17) // 20    # headroom for compiler-internal scratch

    def footprint(cb, nbuf):
        feat = nbuf * H * W * cb * itemsize      # pipelined feature block(s)
        inter = PH * W * cb * itemsize           # stage-1 VMEM scratch
        out = 2 * PH * PW * cb * itemsize        # double-buffered output block
        return feat + inter + out

    if footprint(C, 2) <= usable:                # whole C, double buffered
        return C, C, 2
    if C % 128 != 0 and footprint(C, 1) <= usable:
        return C, C, 1                           # whole C, single buffer (no pad)

    C_pad = -(-C // 128) * 128                   # tile channels (pad if needed)

    def largest_cb(nbuf):
        units = max(1, usable // max(footprint(128, nbuf), 1))
        cb = min(C_pad, units * 128)
        while cb > 128 and C_pad % cb != 0:
            cb -= 128
        return cb

    cb = largest_cb(2)
    if footprint(cb, 2) <= usable:
        return C_pad, cb, 2
    # Last resort: single-buffered feature slab. ROIs are sorted by image, so
    # the block index only changes at image transitions and the exposed DMA is
    # ~once per image per channel slab.
    return C_pad, largest_cb(1), 1


# ----------------------------------------------------------------------------
# Kernel
# ----------------------------------------------------------------------------

def _make_roi_pool_kernel(H, W, PH, PW, CB, hchunk, neg_value):
    n_full = H // hchunk
    tail = H % hchunk

    def kernel(bidx_ref, hs_ref, he_ref, ws_ref, we_ref, feat_ref, out_ref,
               inter_ref):
        del bidx_ref                              # only used by the index_maps
        k = pl.program_id(1)
        dtype = inter_ref.dtype
        neg = jnp.asarray(neg_value, dtype)

        # Hoist the per-ROI bin bounds (scalar SMEM reads) once per grid step.
        hs = [hs_ref[k * PH + ph] for ph in range(PH)]
        he = [he_ref[k * PH + ph] for ph in range(PH)]
        ws = [ws_ref[k * PW + pw] for pw in range(PW)]
        we = [we_ref[k * PW + pw] for pw in range(PW)]
        h_lo, h_hi = hs[0], he[PH - 1]            # bin bounds are monotone in ph

        # ---- Stage 1: per h-bin max over rows, accumulated into VMEM scratch.
        inter_ref[...] = jnp.full((PH, W, CB), neg, dtype)

        def accumulate(row0, nrows):
            data = feat_ref[:, pl.ds(row0, nrows), :, :]      # (1, nrows, W, CB)
            r_idx = row0 + jax.lax.broadcasted_iota(
                jnp.int32, (1, nrows, 1, 1), 1)
            for ph in range(PH):
                hmask = (r_idx >= hs[ph]) & (r_idx < he[ph])
                # Cross-vreg VALU max over rows (no sublane/XLU relayout).
                part = jnp.max(jnp.where(hmask, data, neg), axis=(0, 1))
                inter_ref[ph] = jnp.maximum(inter_ref[ph], part)

        if n_full > 0:
            @pl.loop(0, n_full)
            def _(c):
                row0 = pl.multiple_of(c * hchunk, hchunk)

                # Skip row-chunks that do not intersect the ROI's row range.
                @pl.when((row0 + hchunk > h_lo) & (row0 < h_hi))
                def _():
                    accumulate(row0, hchunk)

        if tail:
            accumulate(H - tail, tail)

        # ---- Stage 2: per w-bin max over the small (W, CB) stage-1 rows.
        w_idx = jax.lax.broadcasted_iota(jnp.int32, (W, 1), 0)
        out_rows = []
        for ph in range(PH):
            row = inter_ref[ph]                               # (W, CB)
            # Empty h-bin -> 0 (matches CUDA roi_pool_forward).
            row = jnp.where(he[ph] > hs[ph], row, jnp.zeros_like(row))
            for pw in range(PW):
                wmask = (w_idx >= ws[pw]) & (w_idx < we[pw])
                v = jnp.max(jnp.where(wmask, row, neg), axis=0, keepdims=True)
                # Empty w-bin -> 0.
                v = jnp.where(we[pw] > ws[pw], v, jnp.zeros_like(v))
                out_rows.append(v)                            # (1, CB)
        out_ref[0] = jnp.concatenate(out_rows, axis=0).astype(out_ref.dtype)

    return kernel


# ----------------------------------------------------------------------------
# Bin-bound math (identical to the CUDA roi_pool_forward index math)
# ----------------------------------------------------------------------------

def _round_half_away(x):
    # CUDA round(): half away from zero (also correct for negative coords).
    return jnp.sign(x) * jnp.floor(jnp.abs(x) + 0.5)


def _roi_bin_bounds(rois, spatial_scale, H, W, PH, PW):
    batch_idx = rois[:, 0].astype(jnp.int32)
    roi_start_w = _round_half_away(rois[:, 1] * spatial_scale).astype(jnp.int32)
    roi_start_h = _round_half_away(rois[:, 2] * spatial_scale).astype(jnp.int32)
    roi_end_w = _round_half_away(rois[:, 3] * spatial_scale).astype(jnp.int32)
    roi_end_h = _round_half_away(rois[:, 4] * spatial_scale).astype(jnp.int32)

    roi_w = jnp.maximum(roi_end_w - roi_start_w + 1, 1)
    roi_h = jnp.maximum(roi_end_h - roi_start_h + 1, 1)
    bin_h = roi_h.astype(jnp.float32) / float(PH)
    bin_w = roi_w.astype(jnp.float32) / float(PW)

    ph = jnp.arange(PH, dtype=jnp.float32)
    pw = jnp.arange(PW, dtype=jnp.float32)

    hstart = jnp.floor(ph[None, :] * bin_h[:, None]).astype(jnp.int32) + roi_start_h[:, None]
    hend = jnp.ceil((ph[None, :] + 1.0) * bin_h[:, None]).astype(jnp.int32) + roi_start_h[:, None]
    wstart = jnp.floor(pw[None, :] * bin_w[:, None]).astype(jnp.int32) + roi_start_w[:, None]
    wend = jnp.ceil((pw[None, :] + 1.0) * bin_w[:, None]).astype(jnp.int32) + roi_start_w[:, None]

    hstart = jnp.clip(hstart, 0, H)
    hend = jnp.clip(hend, 0, H)
    wstart = jnp.clip(wstart, 0, W)
    wend = jnp.clip(wend, 0, W)
    return batch_idx, hstart, hend, wstart, wend


# ----------------------------------------------------------------------------
# Public entry point
# ----------------------------------------------------------------------------

@functools.partial(jax.jit,
                   static_argnames=("output_size", "spatial_scale",
                                    "channels_last"))
def roi_pool(features, rois, output_size, spatial_scale, channels_last=False):
    """ROIPool forward.

    features: (N, C, H, W)  (or (N, H, W, C) if channels_last=True)
    rois:     (K, 5)  [batch_idx, x1, y1, x2, y2]
    Returns:  (K, C, PH, PW)
    """
    PH, PW = output_size
    if channels_last:
        N, H, W, C = features.shape
        feats_nhwc = features
    else:
        N, C, H, W = features.shape
        # One-time layout pass; pass channels_last=True to skip it entirely.
        feats_nhwc = jnp.transpose(features, (0, 2, 3, 1))      # (N, H, W, C)
    K = rois.shape[0]

    batch_idx, hstart, hend, wstart, wend = _roi_bin_bounds(
        rois, spatial_scale, H, W, PH, PW)
    batch_idx = jnp.clip(batch_idx, 0, N - 1)   # no runtime OOB check in VMEM

    # Sort ROIs by image so consecutive grid steps reuse the resident feature
    # block (feature HBM traffic ~ N*C*H*W instead of K*C*H*W).
    order = jnp.argsort(batch_idx)
    inv_order = jnp.argsort(order)

    bidx_s = batch_idx[order]                    # (K,)
    hs_s = hstart[order].reshape(-1)             # (K*PH,)  flat 1-D SMEM tables
    he_s = hend[order].reshape(-1)
    ws_s = wstart[order].reshape(-1)
    we_s = wend[order].reshape(-1)

    itemsize = jnp.dtype(features.dtype).itemsize
    vmem_limit = _vmem_limit_bytes()
    C_pad, CB, feat_bufs = _plan_channel_blocking(
        C, H, W, PH, PW, itemsize, vmem_limit)
    if C_pad != C:
        feats_nhwc = jnp.pad(feats_nhwc, ((0, 0), (0, 0), (0, 0), (0, C_pad - C)))
    num_cb = C_pad // CB

    if jnp.issubdtype(features.dtype, jnp.floating):
        neg_value = float("-inf")
    else:
        neg_value = int(jnp.iinfo(features.dtype).min)
    hchunk = {4: 8, 2: 16, 1: 32}.get(itemsize, 8)   # sublane-aligned row chunks

    kernel = _make_roi_pool_kernel(H, W, PH, PW, CB, hchunk, neg_value)

    feat_spec_kwargs = {}
    if feat_bufs != 2:
        # Single-buffer the (large) feature slab: with sorted ROIs the block
        # index only changes at image transitions, so double-buffering it buys
        # almost nothing but costs a second H*W*CB buffer.
        feat_spec_kwargs["pipeline_mode"] = pl.Buffered(feat_bufs)

    grid_spec = pltpu.PrefetchScalarGridSpec(
        num_scalar_prefetch=5,
        grid=(num_cb, K),                        # channel slab outer, ROI inner
        in_specs=[
            pl.BlockSpec((1, H, W, CB),
                         lambda cb, k, bidx, hs, he, ws, we: (bidx[k], 0, 0, cb),
                         **feat_spec_kwargs),
        ],
        out_specs=pl.BlockSpec((1, PH * PW, CB),
                               lambda cb, k, bidx, hs, he, ws, we: (k, 0, cb)),
        scratch_shapes=[pltpu.VMEM((PH, W, CB), features.dtype)],
    )

    out_sorted = pl.pallas_call(
        kernel,
        out_shape=jax.ShapeDtypeStruct((K, PH * PW, C_pad), features.dtype),
        grid_spec=grid_spec,
        compiler_params=pltpu.CompilerParams(
            # ROI axis parallel (v7x megacore splits sorted-ROI runs across its
            # two TensorCores); channel-slab axis kept arbitrary.
            dimension_semantics=("arbitrary", "parallel"),
            vmem_limit_bytes=int(vmem_limit)),
    )(bidx_s, hs_s, he_s, ws_s, we_s, feats_nhwc)

    out = jnp.take(out_sorted, inv_order, axis=0)          # undo ROI sort
    out = out[..., :C].reshape(K, PH, PW, C)               # drop channel pad
    return jnp.transpose(out, (0, 3, 1, 2))                # (K, C, PH, PW)


class ROIPool:
    """Mirror of the PyTorch ROIPool module (forward only)."""

    def __init__(self, output_size, spatial_scale):
        if isinstance(output_size, int):
            output_size = (output_size, output_size)
        self.output_size = tuple(output_size)
        self.spatial_scale = float(spatial_scale)

    def __call__(self, input, rois):
        return roi_pool(input, rois, self.output_size, self.spatial_scale)

    def __repr__(self):
        return (self.__class__.__name__ + "(output_size=" + str(self.output_size)
                + ", spatial_scale=" + str(self.spatial_scale) + ")")


# ----------------------------------------------------------------------------
# Reference + test
# ----------------------------------------------------------------------------

def _reference_roi_pool(features, rois, output_size, spatial_scale):
    """Pure numpy reference for verification."""
    PH, PW = output_size
    feats = np.asarray(features)
    N, C, H, W = feats.shape
    K = rois.shape[0]
    bidx, hs, he, ws, we = [np.asarray(a) for a in
                            _roi_bin_bounds(jnp.asarray(rois), spatial_scale,
                                            H, W, PH, PW)]
    bidx = np.clip(bidx, 0, N - 1)
    out = np.zeros((K, C, PH, PW), dtype=feats.dtype)
    for k in range(K):
        fm = feats[bidx[k]]
        for ph in range(PH):
            for pw in range(PW):
                h0, h1, w0, w1 = hs[k, ph], he[k, ph], ws[k, pw], we[k, pw]
                if h1 <= h0 or w1 <= w0:
                    out[k, :, ph, pw] = 0.0
                else:
                    out[k, :, ph, pw] = fm[:, h0:h1, w0:w1].max(axis=(1, 2))
    return out


if __name__ == "__main__":
    key = jax.random.PRNGKey(0)

    N, C, H, W = 2, 4, 16, 16
    output_size = (4, 4)
    spatial_scale = 0.5          # boxes live in a 32x32 image space

    features = jax.random.normal(key, (N, C, H, W), dtype=jnp.float32)

    # Deterministic ROI mix exercising ordinary boxes, full-image boxes, tiny
    # boxes, boxes partially outside the map (empty bins), and degenerate boxes.
    rois = jnp.array([
        [0.0,  4.0,  2.0, 20.0, 25.0],   # ordinary box, image 0
        [1.0,  0.0,  0.0, 31.0, 31.0],   # full-image box, image 1
        [0.0, 10.5, 11.2, 11.0, 12.0],   # tiny box
        [1.0, -6.0, -8.0,  5.0,  4.0],   # partially outside (negative coords)
        [0.0, 28.0, 26.0, 40.0, 38.0],   # partially outside (beyond the map)
        [1.0, 14.0,  3.0, 14.0,  3.0],   # degenerate point box
    ], dtype=jnp.float32)

    pooler = ROIPool(output_size, spatial_scale)
    out = jax.block_until_ready(pooler(features, rois))

    ref = _reference_roi_pool(features, rois, output_size, spatial_scale)
    np.testing.assert_allclose(np.asarray(out), ref, rtol=1e-6, atol=1e-6)
    assert out.shape == (rois.shape[0], C) + tuple(output_size)

    print("KERNEL_OK")
</pallas_src>

<mosaic_0001>
module attributes {stable_mosaic.version = 11 : i64} {
  func.func @kernel(%arg0: i32, %arg1: i32, %arg2: memref<6xi32, #tpu.memory_space<smem>>, %arg3: memref<24xi32, #tpu.memory_space<smem>>, %arg4: memref<24xi32, #tpu.memory_space<smem>>, %arg5: memref<24xi32, #tpu.memory_space<smem>>, %arg6: memref<24xi32, #tpu.memory_space<smem>>, %arg7: memref<1x16x16x4xf32, #tpu.memory_space<vmem>>, %arg8: memref<1x16x4xf32, #tpu.memory_space<vmem>>, %arg9: memref<4x16x4xf32, #tpu.memory_space<vmem>>) attributes {dimension_semantics = [#tpu.dimension_semantics<arbitrary>, #tpu.dimension_semantics<parallel>], iteration_bounds = array<i64: 1, 6>, scalar_prefetch = 5 : i64, scratch_operands = 1 : i64, tpu.core_type = #tpu.core_type<tc>, window_params = [{transform_indices = @transform_0, window_bounds = array<i64: 1, 16, 16, 4>}, {transform_indices = @transform_1, window_bounds = array<i64: 1, 16, 4>}]} {
    %c4_i32 = arith.constant 4 : i32
    %0 = arith.muli %arg1, %c4_i32 : i32
    %c0_i32 = arith.constant 0 : i32
    %1 = arith.addi %0, %c0_i32 : i32
    %2 = arith.index_cast %1 : i32 to index
    %3 = memref.load %arg3[%2] : memref<24xi32, #tpu.memory_space<smem>>
    %c4_i32_0 = arith.constant 4 : i32
    %4 = arith.muli %arg1, %c4_i32_0 : i32
    %c1_i32 = arith.constant 1 : i32
    %5 = arith.addi %4, %c1_i32 : i32
    %6 = arith.index_cast %5 : i32 to index
    %7 = memref.load %arg3[%6] : memref<24xi32, #tpu.memory_space<smem>>
    %c4_i32_1 = arith.constant 4 : i32
    %8 = arith.muli %arg1, %c4_i32_1 : i32
    %c2_i32 = arith.constant 2 : i32
    %9 = arith.addi %8, %c2_i32 : i32
    %10 = arith.index_cast %9 : i32 to index
    %11 = memref.load %arg3[%10] : memref<24xi32, #tpu.memory_space<smem>>
    %c4_i32_2 = arith.constant 4 : i32
    %12 = arith.muli %arg1, %c4_i32_2 : i32
    %c3_i32 = arith.constant 3 : i32
    %13 = arith.addi %12, %c3_i32 : i32
    %14 = arith.index_cast %13 : i32 to index
    %15 = memref.load %arg3[%14] : memref<24xi32, #tpu.memory_space<smem>>
    %c4_i32_3 = arith.constant 4 : i32
    %16 = arith.muli %arg1, %c4_i32_3 : i32
    %c0_i32_4 = arith.constant 0 : i32
    %17 = arith.addi %16, %c0_i32_4 : i32
    %18 = arith.index_cast %17 : i32 to index
    %19 = memref.load %arg4[%18] : memref<24xi32, #tpu.memory_space<smem>>
    %c4_i32_5 = arith.constant 4 : i32
    %20 = arith.muli %arg1, %c4_i32_5 : i32
    %c1_i32_6 = arith.constant 1 : i32
    %21 = arith.addi %20, %c1_i32_6 : i32
    %22 = arith.index_cast %21 : i32 to index
    %23 = memref.load %arg4[%22] : memref<24xi32, #tpu.memory_space<smem>>
    %c4_i32_7 = arith.constant 4 : i32
    %24 = arith.muli %arg1, %c4_i32_7 : i32
    %c2_i32_8 = arith.constant 2 : i32
    %25 = arith.addi %24, %c2_i32_8 : i32
    %26 = arith.index_cast %25 : i32 to index
    %27 = memref.load %arg4[%26] : memref<24xi32, #tpu.memory_space<smem>>
    %c4_i32_9 = arith.constant 4 : i32
    %28 = arith.muli %arg1, %c4_i32_9 : i32
    %c3_i32_10 = arith.constant 3 : i32
    %29 = arith.addi %28, %c3_i32_10 : i32
    %30 = arith.index_cast %29 : i32 to index
    %31 = memref.load %arg4[%30] : memref<24xi32, #tpu.memory_space<smem>>
    %c4_i32_11 = arith.constant 4 : i32
    %32 = arith.muli %arg1, %c4_i32_11 : i32
    %c0_i32_12 = arith.constant 0 : i32
    %33 = arith.addi %32, %c0_i32_12 : i32
    %34 = arith.index_cast %33 : i32 to index
    %35 = memref.load %arg5[%34] : memref<24xi32, #tpu.memory_space<smem>>
    %c4_i32_13 = arith.constant 4 : i32
    %36 = arith.muli %arg1, %c4_i32_13 : i32
    %c1_i32_14 = arith.constant 1 : i32
    %37 = arith.addi %36, %c1_i32_14 : i32
    %38 = arith.index_cast %37 : i32 to index
    %39 = memref.load %arg5[%38] : memref<24xi32, #tpu.memory_space<smem>>
    %c4_i32_15 = arith.constant 4 : i32
    %40 = arith.muli %arg1, %c4_i32_15 : i32
    %c2_i32_16 = arith.constant 2 : i32
    %41 = arith.addi %40, %c2_i32_16 : i32
    %42 = arith.index_cast %41 : i32 to index
    %43 = memref.load %arg5[%42] : memref<24xi32, #tpu.memory_space<smem>>
    %c4_i32_17 = arith.constant 4 : i32
    %44 = arith.muli %arg1, %c4_i32_17 : i32
    %c3_i32_18 = arith.constant 3 : i32
    %45 = arith.addi %44, %c3_i32_18 : i32
    %46 = arith.index_cast %45 : i32 to index
    %47 = memref.load %arg5[%46] : memref<24xi32, #tpu.memory_space<smem>>
    %c4_i32_19 = arith.constant 4 : i32
    %48 = arith.muli %arg1, %c4_i32_19 : i32
    %c0_i32_20 = arith.constant 0 : i32
    %49 = arith.addi %48, %c0_i32_20 : i32
    %50 = arith.index_cast %49 : i32 to index
    %51 = memref.load %arg6[%50] : memref<24xi32, #tpu.memory_space<smem>>
    %c4_i32_21 = arith.constant 4 : i32
    %52 = arith.muli %arg1, %c4_i32_21 : i32
    %c1_i32_22 = arith.constant 1 : i32
    %53 = arith.addi %52, %c1_i32_22 : i32
    %54 = arith.index_cast %53 : i32 to index
    %55 = memref.load %arg6[%54] : memref<24xi32, #tpu.memory_space<smem>>
    %c4_i32_23 = arith.constant 4 : i32
    %56 = arith.muli %arg1, %c4_i32_23 : i32
    %c2_i32_24 = arith.constant 2 : i32
    %57 = arith.addi %56, %c2_i32_24 : i32
    %58 = arith.index_cast %57 : i32 to index
    %59 = memref.load %arg6[%58] : memref<24xi32, #tpu.memory_space<smem>>
    %c4_i32_25 = arith.constant 4 : i32
    %60 = arith.muli %arg1, %c4_i32_25 : i32
    %c3_i32_26 = arith.constant 3 : i32
    %61 = arith.addi %60, %c3_i32_26 : i32
    %62 = arith.index_cast %61 : i32 to index
    %63 = memref.load %arg6[%62] : memref<24xi32, #tpu.memory_space<smem>>
    %cst = arith.constant 0xFF800000 : f32
    %64 = vector.broadcast %cst : f32 to vector<4x16x4xf32>
    %c0 = arith.constant 0 : index
    %c0_27 = arith.constant 0 : index
    %c0_28 = arith.constant 0 : index
    %65 = vector.load %arg9[%c0, %c0_27, %c0_28] : memref<4x16x4xf32, #tpu.memory_space<vmem>>, vector<4x16x4xf32>
    tpu.vector_store %arg9[%c0, %c0_27, %c0_28], %64 {strides = array<i32>} : memref<4x16x4xf32, #tpu.memory_space<vmem>>, vector<4x16x4xf32>,
    %cst_29 = arith.constant 0xFF800000 : f32
    %c0_i32_30 = arith.constant 0 : i32
    %c2_i32_31 = arith.constant 2 : i32
    %66 = arith.addi %c0_i32_30, %c2_i32_31 : i32
    %c1_i32_32 = arith.constant 1 : i32
    scf.for %arg10 = %c0_i32_30 to %66 step %c1_i32_32  : i32 {
      %c1_i32_98 = arith.constant 1 : i32
      %316 = arith.muli %arg10, %c1_i32_98 : i32
      %c0_i32_99 = arith.constant 0 : i32
      %317 = arith.addi %c0_i32_99, %316 : i32
      %c8_i32 = arith.constant 8 : i32
      %318 = arith.muli %317, %c8_i32 : i32
      %319 = tpu.assume_multiple %318, 8 : i32
      %c8_i32_100 = arith.constant 8 : i32
      %320 = arith.addi %319, %c8_i32_100 : i32
      %321 = arith.cmpi sgt, %320, %3 : i32
      %322 = arith.cmpi slt, %319, %31 : i32
      %323 = arith.andi %321, %322 : i1
      %324 = arith.extui %323 : i1 to i32
      %c0_i32_101 = arith.constant 0 : i32
      %325 = arith.cmpi ne, %324, %c0_i32_101 : i32
      scf.if %325 {
        %c0_102 = arith.constant 0 : index
        %326 = arith.index_cast %319 : i32 to index
        %c0_103 = arith.constant 0 : index
        %c0_104 = arith.constant 0 : index
        %327 = vector.load %arg7[%c0_102, %326, %c0_103, %c0_104] : memref<1x16x16x4xf32, #tpu.memory_space<vmem>>, vector<1x8x16x4xf32>
        %328 = tpu.iota {dimensions = array<i32: 1>} : vector<1x8x1x1xi32>
        %329 = vector.broadcast %319 : i32 to vector<1x8x1x1xi32>
        %330 = arith.addi %329, %328 : vector<1x8x1x1xi32>
        %331 = vector.broadcast %3 : i32 to vector<1x8x1x1xi32>
        %332 = arith.cmpi sge, %330, %331 : vector<1x8x1x1xi32>
        %333 = vector.broadcast %19 : i32 to vector<1x8x1x1xi32>
        %334 = arith.cmpi slt, %330, %333 : vector<1x8x1x1xi32>
        %335 = arith.andi %332, %334 : vector<1x8x1x1xi1>
        %336 = vector.shape_cast %335 : vector<1x8x1x1xi1> to vector<1x8x1x1xi1>
        %337 = vector.broadcast %336 : vector<1x8x1x1xi1> to vector<1x8x16x4xi1>
        %338 = vector.broadcast %cst_29 : f32 to vector<1x8x16x4xf32>
        %339 = arith.select %337, %327, %338 : vector<1x8x16x4xi1>, vector<1x8x16x4xf32>
        %cst_105 = arith.constant dense<0xFF800000> : vector<16x4xf32>
        %340 = vector.multi_reduction <maximumf>, %339, %cst_105 [0, 1] : vector<1x8x16x4xf32> to vector<16x4xf32>
        %c0_106 = arith.constant 0 : index
        %c0_107 = arith.constant 0 : index
        %c0_108 = arith.constant 0 : index
        %341 = vector.load %arg9[%c0_106, %c0_107, %c0_108] : memref<4x16x4xf32, #tpu.memory_space<vmem>>, vector<1x16x4xf32>
        %342 = vector.shape_cast %341 : vector<1x16x4xf32> to vector<16x4xf32>
        %343 = arith.maximumf %342, %340 : vector<16x4xf32>
        %c0_109 = arith.constant 0 : index
        %c0_110 = arith.constant 0 : index
        %c0_111 = arith.constant 0 : index
        %344 = vector.load %arg9[%c0_109, %c0_110, %c0_111] : memref<4x16x4xf32, #tpu.memory_space<vmem>>, vector<1x16x4xf32>
        %345 = vector.shape_cast %344 : vector<1x16x4xf32> to vector<16x4xf32>
        %346 = vector.shape_cast %343 : vector<16x4xf32> to vector<1x16x4xf32>
        tpu.vector_store %arg9[%c0_109, %c0_110, %c0_111], %346 {strides = array<i32>} : memref<4x16x4xf32, #tpu.memory_space<vmem>>, vector<1x16x4xf32>,
        %347 = vector.broadcast %7 : i32 to vector<1x8x1x1xi32>
        %348 = arith.cmpi sge, %330, %347 : vector<1x8x1x1xi32>
        %349 = vector.broadcast %23 : i32 to vector<1x8x1x1xi32>
        %350 = arith.cmpi slt, %330, %349 : vector<1x8x1x1xi32>
        %351 = arith.andi %348, %350 : vector<1x8x1x1xi1>
        %352 = vector.shape_cast %351 : vector<1x8x1x1xi1> to vector<1x8x1x1xi1>
        %353 = vector.broadcast %352 : vector<1x8x1x1xi1> to vector<1x8x16x4xi1>
        %354 = vector.broadcast %cst_29 : f32 to vector<1x8x16x4xf32>
        %355 = arith.select %353, %327, %354 : vector<1x8x16x4xi1>, vector<1x8x16x4xf32>
        %cst_112 = arith.constant dense<0xFF800000> : vector<16x4xf32>
        %356 = vector.multi_reduction <maximumf>, %355, %cst_112 [0, 1] : vector<1x8x16x4xf32> to vector<16x4xf32>
        %c1_113 = arith.constant 1 : index
        %c0_114 = arith.constant 0 : index
        %c0_115 = arith.constant 0 : index
        %357 = vector.load %arg9[%c1_113, %c0_114, %c0_115] : memref<4x16x4xf32, #tpu.memory_space<vmem>>, vector<1x16x4xf32>
        %358 = vector.shape_cast %357 : vector<1x16x4xf32> to vector<16x4xf32>
        %359 = arith.maximumf %358, %356 : vector<16x4xf32>
        %c1_116 = arith.constant 1 : index
        %c0_117 = arith.constant 0 : index
        %c0_118 = arith.constant 0 : index
        %360 = vector.load %arg9[%c1_116, %c0_117, %c0_118] : memref<4x16x4xf32, #tpu.memory_space<vmem>>, vector<1x16x4xf32>
        %361 = vector.shape_cast %360 : vector<1x16x4xf32> to vector<16x4xf32>
        %362 = vector.shape_cast %359 : vector<16x4xf32> to vector<1x16x4xf32>
        tpu.vector_store %arg9[%c1_116, %c0_117, %c0_118], %362 {strides = array<i32>} : memref<4x16x4xf32, #tpu.memory_space<vmem>>, vector<1x16x4xf32>,
        %363 = vector.broadcast %11 : i32 to vector<1x8x1x1xi32>
        %364 = arith.cmpi sge, %330, %363 : vector<1x8x1x1xi32>
        %365 = vector.broadcast %27 : i32 to vector<1x8x1x1xi32>
        %366 = arith.cmpi slt, %330, %365 : vector<1x8x1x1xi32>
        %367 = arith.andi %364, %366 : vector<1x8x1x1xi1>
        %368 = vector.shape_cast %367 : vector<1x8x1x1xi1> to vector<1x8x1x1xi1>
        %369 = vector.broadcast %368 : vector<1x8x1x1xi1> to vector<1x8x16x4xi1>
        %370 = vector.broadcast %cst_29 : f32 to vector<1x8x16x4xf32>
        %371 = arith.select %369, %327, %370 : vector<1x8x16x4xi1>, vector<1x8x16x4xf32>
        %cst_119 = arith.constant dense<0xFF800000> : vector<16x4xf32>
        %372 = vector.multi_reduction <maximumf>, %371, %cst_119 [0, 1] : vector<1x8x16x4xf32> to vector<16x4xf32>
        %c2_120 = arith.constant 2 : index
        %c0_121 = arith.constant 0 : index
        %c0_122 = arith.constant 0 : index
        %373 = vector.load %arg9[%c2_120, %c0_121, %c0_122] : memref<4x16x4xf32, #tpu.memory_space<vmem>>, vector<1x16x4xf32>
        %374 = vector.shape_cast %373 : vector<1x16x4xf32> to vector<16x4xf32>
        %375 = arith.maximumf %374, %372 : vector<16x4xf32>
        %c2_123 = arith.constant 2 : index
        %c0_124 = arith.constant 0 : index
        %c0_125 = arith.constant 0 : index
        %376 = vector.load %arg9[%c2_123, %c0_124, %c0_125] : memref<4x16x4xf32, #tpu.memory_space<vmem>>, vector<1x16x4xf32>
        %377 = vector.shape_cast %376 : vector<1x16x4xf32> to vector<16x4xf32>
        %378 = vector.shape_cast %375 : vector<16x4xf32> to vector<1x16x4xf32>
        tpu.vector_store %arg9[%c2_123, %c0_124, %c0_125], %378 {strides = array<i32>} : memref<4x16x4xf32, #tpu.memory_space<vmem>>, vector<1x16x4xf32>,
        %379 = vector.broadcast %15 : i32 to vector<1x8x1x1xi32>
        %380 = arith.cmpi sge, %330, %379 : vector<1x8x1x1xi32>
        %381 = vector.broadcast %31 : i32 to vector<1x8x1x1xi32>
        %382 = arith.cmpi slt, %330, %381 : vector<1x8x1x1xi32>
        %383 = arith.andi %380, %382 : vector<1x8x1x1xi1>
        %384 = vector.shape_cast %383 : vector<1x8x1x1xi1> to vector<1x8x1x1xi1>
        %385 = vector.broadcast %384 : vector<1x8x1x1xi1> to vector<1x8x16x4xi1>
        %386 = vector.broadcast %cst_29 : f32 to vector<1x8x16x4xf32>
        %387 = arith.select %385, %327, %386 : vector<1x8x16x4xi1>, vector<1x8x16x4xf32>
        %cst_126 = arith.constant dense<0xFF800000> : vector<16x4xf32>
        %388 = vector.multi_reduction <maximumf>, %387, %cst_126 [0, 1] : vector<1x8x16x4xf32> to vector<16x4xf32>
        %c3_127 = arith.constant 3 : index
        %c0_128 = arith.constant 0 : index
        %c0_129 = arith.constant 0 : index
        %389 = vector.load %arg9[%c3_127, %c0_128, %c0_129] : memref<4x16x4xf32, #tpu.memory_space<vmem>>, vector<1x16x4xf32>
        %390 = vector.shape_cast %389 : vector<1x16x4xf32> to vector<16x4xf32>
        %391 = arith.maximumf %390, %388 : vector<16x4xf32>
        %c3_130 = arith.constant 3 : index
        %c0_131 = arith.constant 0 : index
        %c0_132 = arith.constant 0 : index
        %392 = vector.load %arg9[%c3_130, %c0_131, %c0_132] : memref<4x16x4xf32, #tpu.memory_space<vmem>>, vector<1x16x4xf32>
        %393 = vector.shape_cast %392 : vector<1x16x4xf32> to vector<16x4xf32>
        %394 = vector.shape_cast %391 : vector<16x4xf32> to vector<1x16x4xf32>
        tpu.vector_store %arg9[%c3_130, %c0_131, %c0_132], %394 {strides = array<i32>} : memref<4x16x4xf32, #tpu.memory_space<vmem>>, vector<1x16x4xf32>,
      } else {
      }
    }
    %c2_i32_33 = arith.constant 2 : i32
    %67 = tpu.iota {dimensions = array<i32: 0>} : vector<16x1xi32>
    %c0_34 = arith.constant 0 : index
    %c0_35 = arith.constant 0 : index
    %c0_36 = arith.constant 0 : index
    %68 = vector.load %arg9[%c0_34, %c0_35, %c0_36] : memref<4x16x4xf32, #tpu.memory_space<vmem>>, vector<1x16x4xf32>
    %69 = vector.shape_cast %68 : vector<1x16x4xf32> to vector<16x4xf32>
    %70 = arith.cmpi sgt, %19, %3 : i32
    %cst_37 = arith.constant 0.000000e+00 : f32
    %71 = vector.broadcast %cst_37 : f32 to vector<16x4xf32>
    %72 = arith.select %70, %69, %71 : vector<16x4xf32>
    %73 = vector.broadcast %35 : i32 to vector<16x1xi32>
    %74 = arith.cmpi sge, %67, %73 : vector<16x1xi32>
    %75 = vector.broadcast %51 : i32 to vector<16x1xi32>
    %76 = arith.cmpi slt, %67, %75 : vector<16x1xi32>
    %77 = arith.andi %74, %76 : vector<16x1xi1>
    %cst_38 = arith.constant 0xFF800000 : f32
    %78 = vector.shape_cast %77 : vector<16x1xi1> to vector<16x1xi1>
    %79 = vector.broadcast %78 : vector<16x1xi1> to vector<16x4xi1>
    %80 = vector.broadcast %cst_38 : f32 to vector<16x4xf32>
    %81 = arith.select %79, %72, %80 : vector<16x4xi1>, vector<16x4xf32>
    %cst_39 = arith.constant dense<0xFF800000> : vector<4xf32>
    %82 = vector.multi_reduction <maximumf>, %81, %cst_39 [0] : vector<16x4xf32> to vector<4xf32>
    %83 = vector.shape_cast %82 : vector<4xf32> to vector<1x4xf32>
    %84 = arith.cmpi sgt, %51, %35 : i32
    %cst_40 = arith.constant 0.000000e+00 : f32
    %85 = vector.broadcast %cst_40 : f32 to vector<1x4xf32>
    %86 = arith.select %84, %83, %85 : vector<1x4xf32>
    %87 = vector.broadcast %39 : i32 to vector<16x1xi32>
    %88 = arith.cmpi sge, %67, %87 : vector<16x1xi32>
    %89 = vector.broadcast %55 : i32 to vector<16x1xi32>
    %90 = arith.cmpi slt, %67, %89 : vector<16x1xi32>
    %91 = arith.andi %88, %90 : vector<16x1xi1>
    %cst_41 = arith.constant 0xFF800000 : f32
    %92 = vector.shape_cast %91 : vector<16x1xi1> to vector<16x1xi1>
    %93 = vector.broadcast %92 : vector<16x1xi1> to vector<16x4xi1>
    %94 = vector.broadcast %cst_41 : f32 to vector<16x4xf32>
    %95 = arith.select %93, %72, %94 : vector<16x4xi1>, vector<16x4xf32>
    %cst_42 = arith.constant dense<0xFF800000> : vector<4xf32>
    %96 = vector.multi_reduction <maximumf>, %95, %cst_42 [0] : vector<16x4xf32> to vector<4xf32>
    %97 = vector.shape_cast %96 : vector<4xf32> to vector<1x4xf32>
    %98 = arith.cmpi sgt, %55, %39 : i32
    %cst_43 = arith.constant 0.000000e+00 : f32
    %99 = vector.broadcast %cst_43 : f32 to vector<1x4xf32>
    %100 = arith.select %98, %97, %99 : vector<1x4xf32>
    %101 = vector.broadcast %43 : i32 to vector<16x1xi32>
    %102 = arith.cmpi sge, %67, %101 : vector<16x1xi32>
    %103 = vector.broadcast %59 : i32 to vector<16x1xi32>
    %104 = arith.cmpi slt, %67, %103 : vector<16x1xi32>
    %105 = arith.andi %102, %104 : vector<16x1xi1>
    %cst_44 = arith.constant 0xFF800000 : f32
    %106 = vector.shape_cast %105 : vector<16x1xi1> to vector<16x1xi1>
    %107 = vector.broadcast %106 : vector<16x1xi1> to vector<16x4xi1>
    %108 = vector.broadcast %cst_44 : f32 to vector<16x4xf32>
    %109 = arith.select %107, %72, %108 : vector<16x4xi1>, vector<16x4xf32>
    %cst_45 = arith.constant dense<0xFF800000> : vector<4xf32>
    %110 = vector.multi_reduction <maximumf>, %109, %cst_45 [0] : vector<16x4xf32> to vector<4xf32>
    %111 = vector.shape_cast %110 : vector<4xf32> to vector<1x4xf32>
    %112 = arith.cmpi sgt, %59, %43 : i32
    %cst_46 = arith.constant 0.000000e+00 : f32
    %113 = vector.broadcast %cst_46 : f32 to vector<1x4xf32>
    %114 = arith.select %112, %111, %113 : vector<1x4xf32>
    %115 = vector.broadcast %47 : i32 to vector<16x1xi32>
    %116 = arith.cmpi sge, %67, %115 : vector<16x1xi32>
    %117 = vector.broadcast %63 : i32 to vector<16x1xi32>
    %118 = arith.cmpi slt, %67, %117 : vector<16x1xi32>
    %119 = arith.andi %116, %118 : vector<16x1xi1>
    %cst_47 = arith.constant 0xFF800000 : f32
    %120 = vector.shape_cast %119 : vector<16x1xi1> to vector<16x1xi1>
    %121 = vector.broadcast %120 : vector<16x1xi1> to vector<16x4xi1>
    %122 = vector.broadcast %cst_47 : f32 to vector<16x4xf32>
    %123 = arith.select %121, %72, %122 : vector<16x4xi1>, vector<16x4xf32>
    %cst_48 = arith.constant dense<0xFF800000> : vector<4xf32>
    %124 = vector.multi_reduction <maximumf>, %123, %cst_48 [0] : vector<16x4xf32> to vector<4xf32>
    %125 = vector.shape_cast %124 : vector<4xf32> to vector<1x4xf32>
    %126 = arith.cmpi sgt, %63, %47 : i32
    %cst_49 = arith.constant 0.000000e+00 : f32
    %127 = vector.broadcast %cst_49 : f32 to vector<1x4xf32>
    %128 = arith.select %126, %125, %127 : vector<1x4xf32>
    %c1 = arith.constant 1 : index
    %c0_50 = arith.constant 0 : index
    %c0_51 = arith.constant 0 : index
    %129 = vector.load %arg9[%c1, %c0_50, %c0_51] : memref<4x16x4xf32, #tpu.memory_space<vmem>>, vector<1x16x4xf32>
    %130 = vector.shape_cast %129 : vector<1x16x4xf32> to vector<16x4xf32>
    %131 = arith.cmpi sgt, %23, %7 : i32
    %cst_52 = arith.constant 0.000000e+00 : f32
    %132 = vector.broadcast %cst_52 : f32 to vector<16x4xf32>
    %133 = arith.select %131, %130, %132 : vector<16x4xf32>
    %134 = vector.broadcast %35 : i32 to vector<16x1xi32>
    %135 = arith.cmpi sge, %67, %134 : vector<16x1xi32>
    %136 = vector.broadcast %51 : i32 to vector<16x1xi32>
    %137 = arith.cmpi slt, %67, %136 : vector<16x1xi32>
    %138 = arith.andi %135, %137 : vector<16x1xi1>
    %cst_53 = arith.constant 0xFF800000 : f32
    %139 = vector.shape_cast %138 : vector<16x1xi1> to vector<16x1xi1>
    %140 = vector.broadcast %139 : vector<16x1xi1> to vector<16x4xi1>
    %141 = vector.broadcast %cst_53 : f32 to vector<16x4xf32>
    %142 = arith.select %140, %133, %141 : vector<16x4xi1>, vector<16x4xf32>
    %cst_54 = arith.constant dense<0xFF800000> : vector<4xf32>
    %143 = vector.multi_reduction <maximumf>, %142, %cst_54 [0] : vector<16x4xf32> to vector<4xf32>
    %144 = vector.shape_cast %143 : vector<4xf32> to vector<1x4xf32>
    %145 = arith.cmpi sgt, %51, %35 : i32
    %cst_55 = arith.constant 0.000000e+00 : f32
    %146 = vector.broadcast %cst_55 : f32 to vector<1x4xf32>
    %147 = arith.select %145, %144, %146 : vector<1x4xf32>
    %148 = vector.broadcast %39 : i32 to vector<16x1xi32>
    %149 = arith.cmpi sge, %67, %148 : vector<16x1xi32>
    %150 = vector.broadcast %55 : i32 to vector<16x1xi32>
    %151 = arith.cmpi slt, %67, %150 : vector<16x1xi32>
    %152 = arith.andi %149, %151 : vector<16x1xi1>
    %cst_56 = arith.constant 0xFF800000 : f32
    %153 = vector.shape_cast %152 : vector<16x1xi1> to vector<16x1xi1>
    %154 = vector.broadcast %153 : vector<16x1xi1> to vector<16x4xi1>
    %155 = vector.broadcast %cst_56 : f32 to vector<16x4xf32>
    %156 = arith.select %154, %133, %155 : vector<16x4xi1>, vector<16x4xf32>
    %cst_57 = arith.constant dense<0xFF800000> : vector<4xf32>
    %157 = vector.multi_reduction <maximumf>, %156, %cst_57 [0] : vector<16x4xf32> to vector<4xf32>
    %158 = vector.shape_cast %157 : vector<4xf32> to vector<1x4xf32>
    %159 = arith.cmpi sgt, %55, %39 : i32
    %cst_58 = arith.constant 0.000000e+00 : f32
    %160 = vector.broadcast %cst_58 : f32 to vector<1x4xf32>
    %161 = arith.select %159, %158, %160 : vector<1x4xf32>
    %162 = vector.broadcast %43 : i32 to vector<16x1xi32>
    %163 = arith.cmpi sge, %67, %162 : vector<16x1xi32>
    %164 = vector.broadcast %59 : i32 to vector<16x1xi32>
    %165 = arith.cmpi slt, %67, %164 : vector<16x1xi32>
    %166 = arith.andi %163, %165 : vector<16x1xi1>
    %cst_59 = arith.constant 0xFF800000 : f32
    %167 = vector.shape_cast %166 : vector<16x1xi1> to vector<16x1xi1>
    %168 = vector.broadcast %167 : vector<16x1xi1> to vector<16x4xi1>
    %169 = vector.broadcast %cst_59 : f32 to vector<16x4xf32>
    %170 = arith.select %168, %133, %169 : vector<16x4xi1>, vector<16x4xf32>
    %cst_60 = arith.constant dense<0xFF800000> : vector<4xf32>
    %171 = vector.multi_reduction <maximumf>, %170, %cst_60 [0] : vector<16x4xf32> to vector<4xf32>
    %172 = vector.shape_cast %171 : vector<4xf32> to vector<1x4xf32>
    %173 = arith.cmpi sgt, %59, %43 : i32
    %cst_61 = arith.constant 0.000000e+00 : f32
    %174 = vector.broadcast %cst_61 : f32 to vector<1x4xf32>
    %175 = arith.select %173, %172, %174 : vector<1x4xf32>
    %176 = vector.broadcast %47 : i32 to vector<16x1xi32>
    %177 = arith.cmpi sge, %67, %176 : vector<16x1xi32>
    %178 = vector.broadcast %63 : i32 to vector<16x1xi32>
    %179 = arith.cmpi slt, %67, %178 : vector<16x1xi32>
    %180 = arith.andi %177, %179 : vector<16x1xi1>
    %cst_62 = arith.constant 0xFF800000 : f32
    %181 = vector.shape_cast %180 : vector<16x1xi1> to vector<16x1xi1>
    %182 = vector.broadcast %181 : vector<16x1xi1> to vector<16x4xi1>
    %183 = vector.broadcast %cst_62 : f32 to vector<16x4xf32>
    %184 = arith.select %182, %133, %183 : vector<16x4xi1>, vector<16x4xf32>
    %cst_63 = arith.constant dense<0xFF800000> : vector<4xf32>
    %185 = vector.multi_reduction <maximumf>, %184, %cst_63 [0] : vector<16x4xf32> to vector<4xf32>
    %186 = vector.shape_cast %185 : vector<4xf32> to vector<1x4xf32>
    %187 = arith.cmpi sgt, %63, %47 : i32
    %cst_64 = arith.constant 0.000000e+00 : f32
    %188 = vector.broadcast %cst_64 : f32 to vector<1x4xf32>
    %189 = arith.select %187, %186, %188 : vector<1x4xf32>
    %c2 = arith.constant 2 : index
    %c0_65 = arith.constant 0 : index
    %c0_66 = arith.constant 0 : index
    %190 = vector.load %arg9[%c2, %c0_65, %c0_66] : memref<4x16x4xf32, #tpu.memory_space<vmem>>, vector<1x16x4xf32>
    %191 = vector.shape_cast %190 : vector<1x16x4xf32> to vector<16x4xf32>
    %192 = arith.cmpi sgt, %27, %11 : i32
    %cst_67 = arith.constant 0.000000e+00 : f32
    %193 = vector.broadcast %cst_67 : f32 to vector<16x4xf32>
    %194 = arith.select %192, %191, %193 : vector<16x4xf32>
    %195 = vector.broadcast %35 : i32 to vector<16x1xi32>
    %196 = arith.cmpi sge, %67, %195 : vector<16x1xi32>
    %197 = vector.broadcast %51 : i32 to vector<16x1xi32>
    %198 = arith.cmpi slt, %67, %197 : vector<16x1xi32>
    %199 = arith.andi %196, %198 : vector<16x1xi1>
    %cst_68 = arith.constant 0xFF800000 : f32
    %200 = vector.shape_cast %199 : vector<16x1xi1> to vector<16x1xi1>
    %201 = vector.broadcast %200 : vector<16x1xi1> to vector<16x4xi1>
    %202 = vector.broadcast %cst_68 : f32 to vector<16x4xf32>
    %203 = arith.select %201, %194, %202 : vector<16x4xi1>, vector<16x4xf32>
    %cst_69 = arith.constant dense<0xFF800000> : vector<4xf32>
    %204 = vector.multi_reduction <maximumf>, %203, %cst_69 [0] : vector<16x4xf32> to vector<4xf32>
    %205 = vector.shape_cast %204 : vector<4xf32> to vector<1x4xf32>
    %206 = arith.cmpi sgt, %51, %35 : i32
    %cst_70 = arith.constant 0.000000e+00 : f32
    %207 = vector.broadcast %cst_70 : f32 to vector<1x4xf32>
    %208 = arith.select %206, %205, %207 : vector<1x4xf32>
    %209 = vector.broadcast %39 : i32 to vector<16x1xi32>
    %210 = arith.cmpi sge, %67, %209 : vector<16x1xi32>
    %211 = vector.broadcast %55 : i32 to vector<16x1xi32>
    %212 = arith.cmpi slt, %67, %211 : vector<16x1xi32>
    %213 = arith.andi %210, %212 : vector<16x1xi1>
    %cst_71 = arith.constant 0xFF800000 : f32
    %214 = vector.shape_cast %213 : vector<16x1xi1> to vector<16x1xi1>
    %215 = vector.broadcast %214 : vector<16x1xi1> to vector<16x4xi1>
    %216 = vector.broadcast %cst_71 : f32 to vector<16x4xf32>
    %217 = arith.select %215, %194, %216 : vector<16x4xi1>, vector<16x4xf32>
    %cst_72 = arith.constant dense<0xFF800000> : vector<4xf32>
    %218 = vector.multi_reduction <maximumf>, %217, %cst_72 [0] : vector<16x4xf32> to vector<4xf32>
    %219 = vector.shape_cast %218 : vector<4xf32> to vector<1x4xf32>
    %220 = arith.cmpi sgt, %55, %39 : i32
    %cst_73 = arith.constant 0.000000e+00 : f32
    %221 = vector.broadcast %cst_73 : f32 to vector<1x4xf32>
    %222 = arith.select %220, %219, %221 : vector<1x4xf32>
    %223 = vector.broadcast %43 : i32 to vector<16x1xi32>
    %224 = arith.cmpi sge, %67, %223 : vector<16x1xi32>
    %225 = vector.broadcast %59 : i32 to vector<16x1xi32>
    %226 = arith.cmpi slt, %67, %225 : vector<16x1xi32>
    %227 = arith.andi %224, %226 : vector<16x1xi1>
    %cst_74 = arith.constant 0xFF800000 : f32
    %228 = vector.shape_cast %227 : vector<16x1xi1> to vector<16x1xi1>
    %229 = vector.broadcast %228 : vector<16x1xi1> to vector<16x4xi1>
    %230 = vector.broadcast %cst_74 : f32 to vector<16x4xf32>
    %231 = arith.select %229, %194, %230 : vector<16x4xi1>, vector<16x4xf32>
    %cst_75 = arith.constant dense<0xFF800000> : vector<4xf32>
    %232 = vector.multi_reduction <maximumf>, %231, %cst_75 [0] : vector<16x4xf32> to vector<4xf32>
    %233 = vector.shape_cast %232 : vector<4xf32> to vector<1x4xf32>
    %234 = arith.cmpi sgt, %59, %43 : i32
    %cst_76 = arith.constant 0.000000e+00 : f32
    %235 = vector.broadcast %cst_76 : f32 to vector<1x4xf32>
    %236 = arith.select %234, %233, %235 : vector<1x4xf32>
    %237 = vector.broadcast %47 : i32 to vector<16x1xi32>
    %238 = arith.cmpi sge, %67, %237 : vector<16x1xi32>
    %239 = vector.broadcast %63 : i32 to vector<16x1xi32>
    %240 = arith.cmpi slt, %67, %239 : vector<16x1xi32>
    %241 = arith.andi %238, %240 : vector<16x1xi1>
    %cst_77 = arith.constant 0xFF800000 : f32
    %242 = vector.shape_cast %241 : vector<16x1xi1> to vector<16x1xi1>
    %243 = vector.broadcast %242 : vector<16x1xi1> to vector<16x4xi1>
    %244 = vector.broadcast %cst_77 : f32 to vector<16x4xf32>
    %245 = arith.select %243, %194, %244 : vector<16x4xi1>, vector<16x4xf32>
    %cst_78 = arith.constant dense<0xFF800000> : vector<4xf32>
    %246 = vector.multi_reduction <maximumf>, %245, %cst_78 [0] : vector<16x4xf32> to vector<4xf32>
    %247 = vector.shape_cast %246 : vector<4xf32> to vector<1x4xf32>
    %248 = arith.cmpi sgt, %63, %47 : i32
    %cst_79 = arith.constant 0.000000e+00 : f32
    %249 = vector.broadcast %cst_79 : f32 to vector<1x4xf32>
    %250 = arith.select %248, %247, %249 : vector<1x4xf32>
    %c3 = arith.constant 3 : index
    %c0_80 = arith.constant 0 : index
    %c0_81 = arith.constant 0 : index
    %251 = vector.load %arg9[%c3, %c0_80, %c0_81] : memref<4x16x4xf32, #tpu.memory_space<vmem>>, vector<1x16x4xf32>
    %252 = vector.shape_cast %251 : vector<1x16x4xf32> to vector<16x4xf32>
    %253 = arith.cmpi sgt, %31, %15 : i32
    %cst_82 = arith.constant 0.000000e+00 : f32
    %254 = vector.broadcast %cst_82 : f32 to vector<16x4xf32>
    %255 = arith.select %253, %252, %254 : vector<16x4xf32>
    %256 = vector.broadcast %35 : i32 to vector<16x1xi32>
    %257 = arith.cmpi sge, %67, %256 : vector<16x1xi32>
    %258 = vector.broadcast %51 : i32 to vector<16x1xi32>
    %259 = arith.cmpi slt, %67, %258 : vector<16x1xi32>
    %260 = arith.andi %257, %259 : vector<16x1xi1>
    %cst_83 = arith.constant 0xFF800000 : f32
    %261 = vector.shape_cast %260 : vector<16x1xi1> to vector<16x1xi1>
    %262 = vector.broadcast %261 : vector<16x1xi1> to vector<16x4xi1>
    %263 = vector.broadcast %cst_83 : f32 to vector<16x4xf32>
    %264 = arith.select %262, %255, %263 : vector<16x4xi1>, vector<16x4xf32>
    %cst_84 = arith.constant dense<0xFF800000> : vector<4xf32>
    %265 = vector.multi_reduction <maximumf>, %264, %cst_84 [0] : vector<16x4xf32> to vector<4xf32>
    %266 = vector.shape_cast %265 : vector<4xf32> to vector<1x4xf32>
    %267 = arith.cmpi sgt, %51, %35 : i32
    %cst_85 = arith.constant 0.000000e+00 : f32
    %268 = vector.broadcast %cst_85 : f32 to vector<1x4xf32>
    %269 = arith.select %267, %266, %268 : vector<1x4xf32>
    %270 = vector.broadcast %39 : i32 to vector<16x1xi32>
    %271 = arith.cmpi sge, %67, %270 : vector<16x1xi32>
    %272 = vector.broadcast %55 : i32 to vector<16x1xi32>
    %273 = arith.cmpi slt, %67, %272 : vector<16x1xi32>
    %274 = arith.andi %271, %273 : vector<16x1xi1>
    %cst_86 = arith.constant 0xFF800000 : f32
    %275 = vector.shape_cast %274 : vector<16x1xi1> to vector<16x1xi1>
    %276 = vector.broadcast %275 : vector<16x1xi1> to vector<16x4xi1>
    %277 = vector.broadcast %cst_86 : f32 to vector<16x4xf32>
    %278 = arith.select %276, %255, %277 : vector<16x4xi1>, vector<16x4xf32>
    %cst_87 = arith.constant dense<0xFF800000> : vector<4xf32>
    %279 = vector.multi_reduction <maximumf>, %278, %cst_87 [0] : vector<16x4xf32> to vector<4xf32>
    %280 = vector.shape_cast %279 : vector<4xf32> to vector<1x4xf32>
    %281 = arith.cmpi sgt, %55, %39 : i32
    %cst_88 = arith.constant 0.000000e+00 : f32
    %282 = vector.broadcast %cst_88 : f32 to vector<1x4xf32>
    %283 = arith.select %281, %280, %282 : vector<1x4xf32>
    %284 = vector.broadcast %43 : i32 to vector<16x1xi32>
    %285 = arith.cmpi sge, %67, %284 : vector<16x1xi32>
    %286 = vector.broadcast %59 : i32 to vector<16x1xi32>
    %287 = arith.cmpi slt, %67, %286 : vector<16x1xi32>
    %288 = arith.andi %285, %287 : vector<16x1xi1>
    %cst_89 = arith.constant 0xFF800000 : f32
    %289 = vector.shape_cast %288 : vector<16x1xi1> to vector<16x1xi1>
    %290 = vector.broadcast %289 : vector<16x1xi1> to vector<16x4xi1>
    %291 = vector.broadcast %cst_89 : f32 to vector<16x4xf32>
    %292 = arith.select %290, %255, %291 : vector<16x4xi1>, vector<16x4xf32>
    %cst_90 = arith.constant dense<0xFF800000> : vector<4xf32>
    %293 = vector.multi_reduction <maximumf>, %292, %cst_90 [0] : vector<16x4xf32> to vector<4xf32>
    %294 = vector.shape_cast %293 : vector<4xf32> to vector<1x4xf32>
    %295 = arith.cmpi sgt, %59, %43 : i32
    %cst_91 = arith.constant 0.000000e+00 : f32
    %296 = vector.broadcast %cst_91 : f32 to vector<1x4xf32>
    %297 = arith.select %295, %294, %296 : vector<1x4xf32>
    %298 = vector.broadcast %47 : i32 to vector<16x1xi32>
    %299 = arith.cmpi sge, %67, %298 : vector<16x1xi32>
    %300 = vector.broadcast %63 : i32 to vector<16x1xi32>
    %301 = arith.cmpi slt, %67, %300 : vector<16x1xi32>
    %302 = arith.andi %299, %301 : vector<16x1xi1>
    %cst_92 = arith.constant 0xFF800000 : f32
    %303 = vector.shape_cast %302 : vector<16x1xi1> to vector<16x1xi1>
    %304 = vector.broadcast %303 : vector<16x1xi1> to vector<16x4xi1>
    %305 = vector.broadcast %cst_92 : f32 to vector<16x4xf32>
    %306 = arith.select %304, %255, %305 : vector<16x4xi1>, vector<16x4xf32>
    %cst_93 = arith.constant dense<0xFF800000> : vector<4xf32>
    %307 = vector.multi_reduction <maximumf>, %306, %cst_93 [0] : vector<16x4xf32> to vector<4xf32>
    %308 = vector.shape_cast %307 : vector<4xf32> to vector<1x4xf32>
    %309 = arith.cmpi sgt, %63, %47 : i32
    %cst_94 = arith.constant 0.000000e+00 : f32
    %310 = vector.broadcast %cst_94 : f32 to vector<1x4xf32>
    %311 = arith.select %309, %308, %310 : vector<1x4xf32>
    %312 = tpu.concatenate %86, %100, %114, %128, %147, %161, %175, %189, %208, %222, %236, %250, %269, %283, %297, %311 in 0 : vector<1x4xf32>, vector<1x4xf32>, vector<1x4xf32>, vector<1x4xf32>, vector<1x4xf32>, vector<1x4xf32>, vector<1x4xf32>, vector<1x4xf32>, vector<1x4xf32>, vector<1x4xf32>, vector<1x4xf32>, vector<1x4xf32>, vector<1x4xf32>, vector<1x4xf32>, vector<1x4xf32>, vector<1x4xf32> -> vector<16x4xf32>
    %c0_95 = arith.constant 0 : index
    %c0_96 = arith.constant 0 : index
    %c0_97 = arith.constant 0 : index
    %313 = vector.load %arg8[%c0_95, %c0_96, %c0_97] : memref<1x16x4xf32, #tpu.memory_space<vmem>>, vector<1x16x4xf32>
    %314 = vector.shape_cast %313 : vector<1x16x4xf32> to vector<16x4xf32>
    %315 = vector.shape_cast %312 : vector<16x4xf32> to vector<1x16x4xf32>
    tpu.vector_store %arg8[%c0_95, %c0_96, %c0_97], %315 {strides = array<i32>} : memref<1x16x4xf32, #tpu.memory_space<vmem>>, vector<1x16x4xf32>,
    return
  }
  func.func @transform_0(%arg0: i32, %arg1: i32, %arg2: memref<6xi32, #tpu.memory_space<smem>>, %arg3: memref<24xi32, #tpu.memory_space<smem>>, %arg4: memref<24xi32, #tpu.memory_space<smem>>, %arg5: memref<24xi32, #tpu.memory_space<smem>>, %arg6: memref<24xi32, #tpu.memory_space<smem>>) -> (i32, i32, i32, i32) {
    %0 = arith.index_cast %arg1 : i32 to index
    %1 = memref.load %arg2[%0] : memref<6xi32, #tpu.memory_space<smem>>
    %c0_i32 = arith.constant 0 : i32
    %c0_i32_0 = arith.constant 0 : i32
    %c0_i32_1 = arith.constant 0 : i32
    return %1, %c0_i32, %c0_i32_0, %arg0 : i32, i32, i32, i32
  }
  func.func @transform_1(%arg0: i32, %arg1: i32, %arg2: memref<6xi32, #tpu.memory_space<smem>>, %arg3: memref<24xi32, #tpu.memory_space<smem>>, %arg4: memref<24xi32, #tpu.memory_space<smem>>, %arg5: memref<24xi32, #tpu.memory_space<smem>>, %arg6: memref<24xi32, #tpu.memory_space<smem>>) -> (i32, i32, i32) {
    %c0_i32 = arith.constant 0 : i32
    %c0_i32_0 = arith.constant 0 : i32
    return %arg1, %c0_i32, %arg0 : i32, i32, i32
  }
}

</mosaic_0001>

<llo_original>
// kernel: roi_pool.1
$region0: #{roi_pool.1}
  #allocation0 [shape = 'u32[]', space=smem, size = 0x4, offset = 0x4, fixed_abs, tag = 'smem constant byte address 0x4 - core index']
  #allocation1 [shape = 'u32[72,128]{1,0:T(1,128)}', space=vmem, size = 0x9000, scoped, tag = 'internal scratch']
  #allocation2 [shape = 'f32[4,16,4]{2,1,0:T(8,128)}', space=vmem, size = 0x8000, scoped, tag = 'scratch operand']
  #allocation3 [shape = 's32[1]{0}', space=sflag, size = 0x4, scoped, tag = 'scoped memory for roi_pool.1']
  #allocation4 [shape = 'u8[512]{0}', space=smem, size = 0x200, scoped, tag = 'prefetched SMEM operand 0']
  #allocation5 [shape = 'u8[512]{0}', space=smem, size = 0x200, scoped, tag = 'prefetched SMEM operand 1']
  #allocation6 [shape = 'u8[512]{0}', space=smem, size = 0x200, scoped, tag = 'prefetched SMEM operand 2']
  #allocation7 [shape = 'u8[512]{0}', space=smem, size = 0x200, scoped, tag = 'prefetched SMEM operand 3']
  #allocation8 [shape = 'u8[512]{0}', space=smem, size = 0x200, scoped, tag = 'prefetched SMEM operand 4']
  %s0 = inlined_call_operand.vmem [shape: s32[6], index: 0, kind: input, shape index: {}]
  %s1 = inlined_call_operand.vmem [shape: s32[24], index: 1, kind: input, shape index: {}]
  %s2 = inlined_call_operand.vmem [shape: s32[24], index: 2, kind: input, shape index: {}]
  %s3 = inlined_call_operand.vmem [shape: s32[24], index: 3, kind: input, shape index: {}]
  %s4 = inlined_call_operand.vmem [shape: s32[24], index: 4, kind: input, shape index: {}]
  %s5 = inlined_call_operand.vmem [shape: f32[2,16,16,4], index: 5, kind: input, shape index: {}]
  %s6 = inlined_call_operand.vmem [shape: f32[6,16,4], index: 6, kind: output, shape index: {}]
  %s7 = sld [smem:[#allocation0]]
  $region48: #{roi_pool.1} parent=0
    _
  %s9 = ssub.s32 1, %s7
  %s10 = scalar_select 0, %s9, %s7
  %s12 = sshll.u32 %s0, 4
  %s13 = int_to_ptr.vmem [resolvable:$true] %s12
  %15 = dma.vmem_to_smem %s13, 16, [#allocation4], [#allocation3]
  %s17 = sshll.u32 %s1, 4
  %s18 = int_to_ptr.vmem [resolvable:$true] %s17
  %20 = dma.vmem_to_smem %s18, 16, [#allocation5], [#allocation3]
  %s22 = sshll.u32 %s2, 4
  %s23 = int_to_ptr.vmem [resolvable:$true] %s22
  %25 = dma.vmem_to_smem %s23, 16, [#allocation6], [#allocation3]
  %s27 = sshll.u32 %s3, 4
  %s28 = int_to_ptr.vmem [resolvable:$true] %s27
  %30 = dma.vmem_to_smem %s28, 16, [#allocation7], [#allocation3]
  %s32 = sshll.u32 %s4, 4
  %s33 = int_to_ptr.vmem [resolvable:$true] %s32
  %35 = dma.vmem_to_smem %s33, 16, [#allocation8], [#allocation3]
  %37 = dma.done [#allocation3], 80
  %38 = sfence
  loop: start=0, step=1, limit=8
  $region2: #{roi_pool.1} parent=0 // loop_pre_header
    _
  $region3: #{roi_pool.1} parent=0 // loop_header
    %s40 = sphi 0, %s44
    %p41 = scmp.ge.s32.totalorder %s40, 8
    %s47 = sphi 0, %s59
    %s48 = sphi 0, %s55
    %s49 = sphi 0, %s47
    %s50 = sphi 0, %s48
    %s51 = sphi 0, %s49
    %s52 = sphi 0, %s50
    %s66 = sphi 0, %s68
    %s69 = sphi 0, %s66
    %s70 = sphi 0, %s69
    %s86 = sphi 0, %s70
    %s94 = sphi 0, %s96
    %s97 = sphi 0, %s94
    %s98 = sphi 0, %s97
    %s114 = sphi 0, %s98
  $region4: #{roi_pool.1} parent=0 // loop_header_branch
    %43 = sbr.rel (%p41) target = $region8
  $region5: #{roi_pool.1} parent=0 // loop_body
    %s45 = ssub.s32 %s40, 1
    %s46 = ssub.s32 %s40, 2
    %s53 = sadd.s32 1, %s48
    %p54 = scmp.ge.s32.totalorder %s53, 6
    %s55 = scalar_select %p54, 0, %s53
    %s56 = sadd.s32 1, %s47
    %s57 = scalar_select %p54, %s56, %s47
    %p58 = scmp.ge.s32.totalorder %s57, 1
    %s59 = scalar_select %p58, 0, %s57
    %s60 = sld [smem:[#allocation4 + %s48]]
    %s61 = sld [smem:[#allocation4 + %s55]]
    %s62 = ssub.s32 %s60, %s61
    %s63 = ssub.s32 %s47, %s59
    %s64 = sor.u32 %s62, %s63
    %p65 = scmp.eq.s32.totalorder %s64, 0
    %s67 = sadd.s32 %s66, 1
    %s68 = scalar_select %p65, %s66, %s67
    %p71 = pneg %p65
    %p72 = scmp.eq.s32.totalorder %s40, 5
    %p73 = por %p71, %p72
    %p74 = scmp.ne.s32.totalorder %s66, %s69
    %p75 = scmp.eq.s32.totalorder %s40, 0
    %p76 = por %p74, %p75
    %p77 = scmp.ne.s32.totalorder %s66, %s69
    %p78 = scmp.eq.s32.totalorder %s45, 5
    %p79 = por %p77, %p78
    %p80 = scmp.ne.s32.totalorder %s69, %s70
    %p81 = scmp.eq.s32.totalorder %s45, 0
    %p82 = por %p80, %p81
    %p83 = scmp.ne.s32.totalorder %s69, %s70
    %p84 = scmp.eq.s32.totalorder %s46, 5
    %p85 = por %p83, %p84
    %p87 = scmp.ne.s32.totalorder %s70, %s86
    %p88 = scmp.eq.s32.totalorder %s46, 0
    %p89 = por %p87, %p88
    %s90 = ssub.s32 %s48, %s55
    %s91 = ssub.s32 %s47, %s59
    %s92 = sor.u32 %s90, %s91
    %p93 = scmp.eq.s32.totalorder %s92, 0
    %s95 = sadd.s32 %s94, 1
    %s96 = scalar_select %p93, %s94, %s95
    %p99 = pneg %p93
    %p100 = scmp.eq.s32.totalorder %s40, 5
    %p101 = por %p99, %p100
    %p102 = scmp.ne.s32.totalorder %s94, %s97
    %p103 = scmp.eq.s32.totalorder %s40, 0
    %p104 = por %p102, %p103
    %p105 = scmp.ne.s32.totalorder %s94, %s97
    %p106 = scmp.eq.s32.totalorder %s45, 5
    %p107 = por %p105, %p106
    %p108 = scmp.ne.s32.totalorder %s97, %s98
    %p109 = scmp.eq.s32.totalorder %s45, 0
    %p110 = por %p108, %p109
    %p111 = scmp.ne.s32.totalorder %s97, %s98
    %p112 = scmp.eq.s32.totalorder %s46, 5
    %p113 = por %p111, %p112
    %p115 = scmp.ne.s32.totalorder %s98, %s114
    %p116 = scmp.eq.s32.totalorder %s46, 0
    %p117 = por %p115, %p116
    %p118 = scmp.le.s32.totalorder 1, %s40
    %p119 = scmp.lt.s32.totalorder %s40, 7
    %p120 = pnand %p118, %p119
    %p121 = pneg %p120
    // Predicated region
    $region9: #{roi_pool.1} parent=5 // pred_check
      _
    $region10: #{roi_pool.1} parent=5 // pred_check_branch
      %123 = sbr.rel (%p120) target = $region12
    $region11: #{roi_pool.1} parent=5 // pred_region
      %s124 = ssub.s32 %s40, 1
    $region12: #{roi_pool.1} parent=5 // pred_fallthru
      _
    %p125 = scmp.lt.s32.totalorder %s40, 6
    // Predicated region
    $region13: #{roi_pool.1} parent=5 // pred_check
      %p126 = pneg %p125
    $region14: #{roi_pool.1} parent=5 // pred_check_branch
      %128 = sbr.rel (%p126) target = $region16
    $region15: #{roi_pool.1} parent=5 // pred_region
      // Predicated region
      $region17: #{roi_pool.1} parent=15 // pred_check
        %p129 = pneg %p76
      $region18: #{roi_pool.1} parent=15 // pred_check_branch
        %131 = sbr.rel (%p129) target = $region20
      $region19: #{roi_pool.1} parent=15 // pred_region
        %s132 = sld [smem:[#allocation4 + %s48]]
        %p133 = scmp.lt.s32.totalorder %s132, 1
        %s134 = scalar_select %p133, %s132, 1
        %p135 = scmp.lt.s32.totalorder %s47, 0
        %s136 = scalar_select %p135, %s47, 0
        %s137 = smul.addr %s134, 32
        %s138 = sadd.s32 %s136, %s137
        %s139 = smul.addr %s138, 8
        %s140 = scalar_lea.vmem %s5, %s139
        %s141 = sld [smem:[#allocation4 + %s48]]
      $region20: #{roi_pool.1} parent=15 // pred_fallthru
        _
    $region16: #{roi_pool.1} parent=5 // pred_fallthru
      _
    %p142 = scmp.le.s32.totalorder 1, %s40
    %p143 = scmp.lt.s32.totalorder %s40, 7
    %p144 = pnand %p142, %p143
    %p145 = pneg %p144
    // Predicated region
    $region21: #{roi_pool.1} parent=5 // pred_check
      _
    $region22: #{roi_pool.1} parent=5 // pred_check_branch
      %147 = sbr.rel (%p144) target = $region24
    $region23: #{roi_pool.1} parent=5 // pred_region
      %s148 = ssub.s32 %s40, 1
      %s149 = sld [smem:[#allocation4 + %s50]]
      %p150 = scmp.lt.s32.totalorder %s149, 1
      %s151 = scalar_select %p150, %s149, 1
      %p152 = scmp.lt.s32.totalorder %s49, 0
      %s153 = scalar_select %p152, %s49, 0
      %s154 = smul.addr %s151, 32
      %s155 = sadd.s32 %s153, %s154
      %s156 = smul.addr %s155, 8
      %s157 = scalar_lea.vmem %s5, %s156
      %p158 = pneg %p82
      %p159 = pneg %p79
      %p160 = pneg %p110
      %p161 = pneg %p107
      %p162 = scmp.lt.s32.totalorder %s50, 5
      %s163 = scalar_select %p162, %s50, 5
      %p164 = scmp.lt.s32.totalorder %s49, 0
      %s165 = scalar_select %p164, %s49, 0
      %s166 = smul.addr %s163, 2
      %s167 = sadd.s32 %s165, %s166
      %s168 = smul.addr %s167, 8
      %s169 = scalar_lea.vmem %s6, %s168
      %s170 = sld [smem:[#allocation4 + %s50]]
      %p171 = scmp.lt.s32.totalorder %s170, 1
      %s172 = scalar_select %p171, %s170, 1
      %p173 = scmp.lt.s32.totalorder %s49, 0
      %s174 = scalar_select %p173, %s49, 0
      %s175 = smul.addr %s172, 32
      %s176 = sadd.s32 %s174, %s175
      %s177 = smul.addr %s176, 8
      %s178 = scalar_lea.vmem %s5, %s177
      %s179 = sld [smem:[#allocation4 + %s50]]
      %p180 = scmp.lt.s32.totalorder %s50, 5
      %s181 = scalar_select %p180, %s50, 5
      %p182 = scmp.lt.s32.totalorder %s49, 0
      %s183 = scalar_select %p182, %s49, 0
      %s184 = smul.addr %s181, 2
      %s185 = sadd.s32 %s183, %s184
      %s186 = smul.addr %s185, 8
      %s187 = scalar_lea.vmem %s6, %s186
      %s188 = smul.u32 %s50, 4
      %s189 = sld [smem:[#allocation5 + %s188]]
      %s190 = sadd.s32 %s188, 1
      %s191 = sld [smem:[#allocation5 + %s190]]
      %s192 = sadd.s32 %s188, 2
      %s193 = sld [smem:[#allocation5 + %s192]]
      %s194 = sadd.s32 %s188, 3
      %s195 = sld [smem:[#allocation5 + %s194]]
      %s196 = sld [smem:[#allocation6 + %s188]]
      %s197 = sld [smem:[#allocation6 + %s190]]
      %s198 = sld [smem:[#allocation6 + %s192]]
      %s199 = sld [smem:[#allocation6 + %s194]]
      %s200 = sld [smem:[#allocation7 + %s188]]
      %s201 = sld [smem:[#allocation7 + %s190]]
      %s202 = sld [smem:[#allocation7 + %s192]]
      %s203 = sld [smem:[#allocation7 + %s194]]
      %s204 = sld [smem:[#allocation8 + %s188]]
      %s205 = sld [smem:[#allocation8 + %s190]]
      %s206 = sld [smem:[#allocation8 + %s192]]
      %s207 = sld [smem:[#allocation8 + %s194]]
      %vm208 = vcmask 31744
      %209 = vst.msk [vmem:[#allocation2] sm:$0xff] %vm208, -inf
      %210 = vst.msk [vmem:[#allocation2 + $0x8] sm:$0xff] %vm208, -inf
      %211 = vst.msk [vmem:[#allocation2 + $0x10] sm:$0xff] %vm208, -inf
      %212 = vst.msk [vmem:[#allocation2 + $0x18] sm:$0xff] %vm208, -inf
      %213 = vst.msk [vmem:[#allocation2 + $0x20] sm:$0xff] %vm208, -inf
      %214 = vst.msk [vmem:[#allocation2 + $0x28] sm:$0xff] %vm208, -inf
      %215 = vst.msk [vmem:[#allocation2 + $0x30] sm:$0xff] %vm208, -inf
      %216 = vst.msk [vmem:[#allocation2 + $0x38] sm:$0xff] %vm208, -inf
      loop: start=0, step=1, limit=2
      $region25: #{roi_pool.1} parent=23 // loop_pre_header
        _
      $region26: #{roi_pool.1} parent=23 // loop_header
        %s218 = sphi 0, %s222
        %p219 = scmp.ge.s32.totalorder %s218, 2
      $region27: #{roi_pool.1} parent=23 // loop_header_branch
        %221 = sbr.rel (%p219) target = $region31
      $region28: #{roi_pool.1} parent=23 // loop_body
        %s223 = smul.u32 %s218, 8
        %s224 = sadd.s32 %s223, 8
        %p225 = scmp.gt.s32.totalorder %s224, %s189
        %p226 = scmp.lt.s32.totalorder %s223, %s199
        %p227 = pnand %p225, %p226
        %p228 = pneg %p227
        // Predicated region
        $region32: #{roi_pool.1} parent=28 // pred_check
          _
        $region33: #{roi_pool.1} parent=28 // pred_check_branch
          %230 = sbr.rel (%p227) target = $region35
        $region34: #{roi_pool.1} parent=28 // pred_region
          %s231 = smul.u32 %s223, 16
          %s232 = scalar_lea.vmem %s178, %s231
          %v233 = vld [vmem:[%s232] sm:$0xff]
          %v234 = vld [vmem:[%s232 + $0x8] sm:$0xff]
          %v235 = vld [vmem:[%s232 + $0x10] sm:$0xff]
          %v236 = vld [vmem:[%s232 + $0x18] sm:$0xff]
          %v237 = vld [vmem:[%s232 + $0x20] sm:$0xff]
          %v238 = vld [vmem:[%s232 + $0x28] sm:$0xff]
          %v239 = vld [vmem:[%s232 + $0x30] sm:$0xff]
          %v240 = vld [vmem:[%s232 + $0x38] sm:$0xff]
          %v241 = vld [vmem:[%s232 + $0x40] sm:$0xff]
          %v242 = vld [vmem:[%s232 + $0x48] sm:$0xff]
          %v243 = vld [vmem:[%s232 + $0x50] sm:$0xff]
          %v244 = vld [vmem:[%s232 + $0x58] sm:$0xff]
          %v245 = vld [vmem:[%s232 + $0x60] sm:$0xff]
          %v246 = vld [vmem:[%s232 + $0x68] sm:$0xff]
          %v247 = vld [vmem:[%s232 + $0x70] sm:$0xff]
          %v248 = vld [vmem:[%s232 + $0x78] sm:$0xff]
          %v249 = vstv %s223
          %v250 = vadd.s32 %v249, 1
          %v251 = vadd.s32 %v249, 2
          %v252 = vadd.s32 %v249, 3
          %v253 = vadd.s32 %v249, 4
          %v254 = vadd.s32 %v249, 5
          %v255 = vadd.s32 %v249, 6
          %v256 = vadd.s32 %v249, 7
          %v257 = vstv %s189
          %vm258 = vcmp.ge.s32.totalorder %v249, %v257
          %vm259 = vcmp.ge.s32.totalorder %v250, %v257
          %vm260 = vcmp.ge.s32.totalorder %v251, %v257
          %vm261 = vcmp.ge.s32.totalorder %v252, %v257
          %vm262 = vcmp.ge.s32.totalorder %v253, %v257
          %vm263 = vcmp.ge.s32.totalorder %v254, %v257
          %vm264 = vcmp.ge.s32.totalorder %v255, %v257
          %vm265 = vcmp.ge.s32.totalorder %v256, %v257
          %v266 = vstv %s196
          %vm267 = vcmp.lt.s32.totalorder %v249, %v266
          %vm268 = vcmp.lt.s32.totalorder %v250, %v266
          %vm269 = vcmp.lt.s32.totalorder %v251, %v266
          %vm270 = vcmp.lt.s32.totalorder %v252, %v266
          %vm271 = vcmp.lt.s32.totalorder %v253, %v266
          %vm272 = vcmp.lt.s32.totalorder %v254, %v266
          %vm273 = vcmp.lt.s32.totalorder %v255, %v266
          %vm274 = vcmp.lt.s32.totalorder %v256, %v266
          %vm275 = vmand %vm258, %vm267
          %vm276 = vmand %vm259, %vm268
          %vm277 = vmand %vm260, %vm269
          %vm278 = vmand %vm261, %vm270
          %vm279 = vmand %vm262, %vm271
          %vm280 = vmand %vm263, %vm272
          %vm281 = vmand %vm264, %vm273
          %vm282 = vmand %vm265, %vm274
          %v283 = vsel %vm275, 1, 0
          %v284 = vsel %vm276, 1, 0
          %v285 = vsel %vm277, 1, 0
          %v286 = vsel %vm278, 1, 0
          %v287 = vsel %vm279, 1, 0
          %v288 = vsel %vm280, 1, 0
          %v289 = vsel %vm281, 1, 0
          %v290 = vsel %vm282, 1, 0
          %vm291 = vcmp.eq.s32.totalorder %v283, 1
          %vm292 = vcmp.eq.s32.totalorder %v284, 1
          %vm293 = vcmp.eq.s32.totalorder %v285, 1
          %vm294 = vcmp.eq.s32.totalorder %v286, 1
          %vm295 = vcmp.eq.s32.totalorder %v287, 1
          %vm296 = vcmp.eq.s32.totalorder %v288, 1
          %vm297 = vcmp.eq.s32.totalorder %v289, 1
          %vm298 = vcmp.eq.s32.totalorder %v290, 1
          %v299 = vsel %vm291, %v233, -inf
          %v300 = vsel %vm291, %v234, -inf
          %v301 = vsel %vm292, %v235, -inf
          %v302 = vsel %vm292, %v236, -inf
          %v303 = vsel %vm293, %v237, -inf
          %v304 = vsel %vm293, %v238, -inf
          %v305 = vsel %vm294, %v239, -inf
          %v306 = vsel %vm294, %v240, -inf
          %v307 = vsel %vm295, %v241, -inf
          %v308 = vsel %vm295, %v242, -inf
          %v309 = vsel %vm296, %v243, -inf
          %v310 = vsel %vm296, %v244, -inf
          %v311 = vsel %vm297, %v245, -inf
          %v312 = vsel %vm297, %v246, -inf
          %v313 = vsel %vm298, %v247, -inf
          %v314 = vsel %vm298, %v248, -inf
          %v315 = vsel %vm208, %v299, -inf
          %v316 = vsel %vm208, %v301, -inf
          %v317 = vsel %vm208, %v303, -inf
          %v318 = vmax.f32 %v315, %v317
          %v319 = vsel %vm208, %v305, -inf
          %v320 = vmax.f32 %v316, %v319
          %v321 = vsel %vm208, %v307, -inf
          %v322 = vmax.f32 %v318, %v321
          %v323 = vsel %vm208, %v309, -inf
          %v324 = vmax.f32 %v320, %v323
          %v325 = vsel %vm208, %v311, -inf
          %v326 = vmax.f32 %v322, %v325
          %v327 = vsel %vm208, %v313, -inf
          %v328 = vmax.f32 %v324, %v327
          %v329 = vmax.f32 %v326, %v328
          %v330 = vsel %vm208, %v300, -inf
          %v331 = vsel %vm208, %v302, -inf
          %v332 = vsel %vm208, %v304, -inf
          %v333 = vmax.f32 %v330, %v332
          %v334 = vsel %vm208, %v306, -inf
          %v335 = vmax.f32 %v331, %v334
          %v336 = vsel %vm208, %v308, -inf
          %v337 = vmax.f32 %v333, %v336
          %v338 = vsel %vm208, %v310, -inf
          %v339 = vmax.f32 %v335, %v338
          %v340 = vsel %vm208, %v312, -inf
          %v341 = vmax.f32 %v337, %v340
          %v342 = vsel %vm208, %v314, -inf
          %v343 = vmax.f32 %v339, %v342
          %v344 = vmax.f32 %v341, %v343
          %v345 = vld [vmem:[#allocation2] sm:$0xff]
          %v346 = vld [vmem:[#allocation2 + $0x8] sm:$0xff]
          %v347 = vmax.f32 %v345, %v329
          %v348 = vmax.f32 %v346, %v344
          %349 = vst.msk [vmem:[#allocation2] sm:$0xff] %vm208, %v347
          %350 = vst.msk [vmem:[#allocation2 + $0x8] sm:$0xff] %vm208, %v348
          %v351 = vstv %s191
          %vm352 = vcmp.ge.s32.totalorder %v249, %v351
          %vm353 = vcmp.ge.s32.totalorder %v250, %v351
          %vm354 = vcmp.ge.s32.totalorder %v251, %v351
          %vm355 = vcmp.ge.s32.totalorder %v252, %v351
          %vm356 = vcmp.ge.s32.totalorder %v253, %v351
          %vm357 = vcmp.ge.s32.totalorder %v254, %v351
          %vm358 = vcmp.ge.s32.totalorder %v255, %v351
          %vm359 = vcmp.ge.s32.totalorder %v256, %v351
          %v360 = vstv %s197
          %vm361 = vcmp.lt.s32.totalorder %v249, %v360
          %vm362 = vcmp.lt.s32.totalorder %v250, %v360
          %vm363 = vcmp.lt.s32.totalorder %v251, %v360
          %vm364 = vcmp.lt.s32.totalorder %v252, %v360
          %vm365 = vcmp.lt.s32.totalorder %v253, %v360
          %vm366 = vcmp.lt.s32.totalorder %v254, %v360
          %vm367 = vcmp.lt.s32.totalorder %v255, %v360
          %vm368 = vcmp.lt.s32.totalorder %v256, %v360
          %vm369 = vmand %vm352, %vm361
          %vm370 = vmand %vm353, %vm362
          %vm371 = vmand %vm354, %vm363
          %vm372 = vmand %vm355, %vm364
          %vm373 = vmand %vm356, %vm365
          %vm374 = vmand %vm357, %vm366
          %vm375 = vmand %vm358, %vm367
          %vm376 = vmand %vm359, %vm368
          %v377 = vsel %vm369, 1, 0
          %v378 = vsel %vm370, 1, 0
          %v379 = vsel %vm371, 1, 0
          %v380 = vsel %vm372, 1, 0
          %v381 = vsel %vm373, 1, 0
          %v382 = vsel %vm374, 1, 0
          %v383 = vsel %vm375, 1, 0
          %v384 = vsel %vm376, 1, 0
          %vm385 = vcmp.eq.s32.totalorder %v377, 1
          %vm386 = vcmp.eq.s32.totalorder %v378, 1
          %vm387 = vcmp.eq.s32.totalorder %v379, 1
          %vm388 = vcmp.eq.s32.totalorder %v380, 1
          %vm389 = vcmp.eq.s32.totalorder %v381, 1
          %vm390 = vcmp.eq.s32.totalorder %v382, 1
          %vm391 = vcmp.eq.s32.totalorder %v383, 1
          %vm392 = vcmp.eq.s32.totalorder %v384, 1
          %v393 = vsel %vm385, %v233, -inf
          %v394 = vsel %vm385, %v234, -inf
          %v395 = vsel %vm386, %v235, -inf
          %v396 = vsel %vm386, %v236, -inf
          %v397 = vsel %vm387, %v237, -inf
          %v398 = vsel %vm387, %v238, -inf
          %v399 = vsel %vm388, %v239, -inf
          %v400 = vsel %vm388, %v240, -inf
          %v401 = vsel %vm389, %v241, -inf
          %v402 = vsel %vm389, %v242, -inf
          %v403 = vsel %vm390, %v243, -inf
          %v404 = vsel %vm390, %v244, -inf
          %v405 = vsel %vm391, %v245, -inf
          %v406 = vsel %vm391, %v246, -inf
          %v407 = vsel %vm392, %v247, -inf
          %v408 = vsel %vm392, %v248, -inf
          %v409 = vsel %vm208, %v393, -inf
          %v410 = vsel %vm208, %v395, -inf
          %v411 = vsel %vm208, %v397, -inf
          %v412 = vmax.f32 %v409, %v411
          %v413 = vsel %vm208, %v399, -inf
          %v414 = vmax.f32 %v410, %v413
          %v415 = vsel %vm208, %v401, -inf
          %v416 = vmax.f32 %v412, %v415
          %v417 = vsel %vm208, %v403, -inf
          %v418 = vmax.f32 %v414, %v417
          %v419 = vsel %vm208, %v405, -inf
          %v420 = vmax.f32 %v416, %v419
          %v421 = vsel %vm208, %v407, -inf
          %v422 = vmax.f32 %v418, %v421
          %v423 = vmax.f32 %v420, %v422
          %v424 = vsel %vm208, %v394, -inf
          %v425 = vsel %vm208, %v396, -inf
          %v426 = vsel %vm208, %v398, -inf
          %v427 = vmax.f32 %v424, %v426
          %v428 = vsel %vm208, %v400, -inf
          %v429 = vmax.f32 %v425, %v428
          %v430 = vsel %vm208, %v402, -inf
          %v431 = vmax.f32 %v427, %v430
          %v432 = vsel %vm208, %v404, -inf
          %v433 = vmax.f32 %v429, %v432
          %v434 = vsel %vm208, %v406, -inf
          %v435 = vmax.f32 %v431, %v434
          %v436 = vsel %vm208, %v408, -inf
          %v437 = vmax.f32 %v433, %v436
          %v438 = vmax.f32 %v435, %v437
          %s439 = scalar_lea.vmem [#allocation2], 16
          %v440 = vld [vmem:[%s439] sm:$0xff]
          %v441 = vld [vmem:[%s439 + $0x8] sm:$0xff]
          %v442 = vmax.f32 %v440, %v423
          %v443 = vmax.f32 %v441, %v438
          %444 = vst.msk [vmem:[%s439] sm:$0xff] %vm208, %v442
          %445 = vst.msk [vmem:[%s439 + $0x8] sm:$0xff] %vm208, %v443
          %v446 = vstv %s193
          %vm447 = vcmp.ge.s32.totalorder %v249, %v446
          %vm448 = vcmp.ge.s32.totalorder %v250, %v446
          %vm449 = vcmp.ge.s32.totalorder %v251, %v446
          %vm450 = vcmp.ge.s32.totalorder %v252, %v446
          %vm451 = vcmp.ge.s32.totalorder %v253, %v446
          %vm452 = vcmp.ge.s32.totalorder %v254, %v446
          %vm453 = vcmp.ge.s32.totalorder %v255, %v446
          %vm454 = vcmp.ge.s32.totalorder %v256, %v446
          %v455 = vstv %s198
          %vm456 = vcmp.lt.s32.totalorder %v249, %v455
          %vm457 = vcmp.lt.s32.totalorder %v250, %v455
          %vm458 = vcmp.lt.s32.totalorder %v251, %v455
          %vm459 = vcmp.lt.s32.totalorder %v252, %v455
          %vm460 = vcmp.lt.s32.totalorder %v253, %v455
          %vm461 = vcmp.lt.s32.totalorder %v254, %v455
          %vm462 = vcmp.lt.s32.totalorder %v255, %v455
          %vm463 = vcmp.lt.s32.totalorder %v256, %v455
          %vm464 = vmand %vm447, %vm456
          %vm465 = vmand %vm448, %vm457
          %vm466 = vmand %vm449, %vm458
          %vm467 = vmand %vm450, %vm459
          %vm468 = vmand %vm451, %vm460
          %vm469 = vmand %vm452, %vm461
          %vm470 = vmand %vm453, %vm462
          %vm471 = vmand %vm454, %vm463
          %v472 = vsel %vm464, 1, 0
          %v473 = vsel %vm465, 1, 0
          %v474 = vsel %vm466, 1, 0
          %v475 = vsel %vm467, 1, 0
          %v476 = vsel %vm468, 1, 0
          %v477 = vsel %vm469, 1, 0
          %v478 = vsel %vm470, 1, 0
          %v479 = vsel %vm471, 1, 0
          %vm480 = vcmp.eq.s32.totalorder %v472, 1
          %vm481 = vcmp.eq.s32.totalorder %v473, 1
          %vm482 = vcmp.eq.s32.totalorder %v474, 1
          %vm483 = vcmp.eq.s32.totalorder %v475, 1
          %vm484 = vcmp.eq.s32.totalorder %v476, 1
          %vm485 = vcmp.eq.s32.totalorder %v477, 1
          %vm486 = vcmp.eq.s32.totalorder %v478, 1
          %vm487 = vcmp.eq.s32.totalorder %v479, 1
          %v488 = vsel %vm480, %v233, -inf
          %v489 = vsel %vm480, %v234, -inf
          %v490 = vsel %vm481, %v235, -inf
          %v491 = vsel %vm481, %v236, -inf
          %v492 = vsel %vm482, %v237, -inf
          %v493 = vsel %vm482, %v238, -inf
          %v494 = vsel %vm483, %v239, -inf
          %v495 = vsel %vm483, %v240, -inf
          %v496 = vsel %vm484, %v241, -inf
          %v497 = vsel %vm484, %v242, -inf
          %v498 = vsel %vm485, %v243, -inf
          %v499 = vsel %vm485, %v244, -inf
          %v500 = vsel %vm486, %v245, -inf
          %v501 = vsel %vm486, %v246, -inf
          %v502 = vsel %vm487, %v247, -inf
          %v503 = vsel %vm487, %v248, -inf
          %v504 = vsel %vm208, %v488, -inf
          %v505 = vsel %vm208, %v490, -inf
          %v506 = vsel %vm208, %v492, -inf
          %v507 = vmax.f32 %v504, %v506
          %v508 = vsel %vm208, %v494, -inf
          %v509 = vmax.f32 %v505, %v508
          %v510 = vsel %vm208, %v496, -inf
          %v511 = vmax.f32 %v507, %v510
          %v512 = vsel %vm208, %v498, -inf
          %v513 = vmax.f32 %v509, %v512
          %v514 = vsel %vm208, %v500, -inf
          %v515 = vmax.f32 %v511, %v514
          %v516 = vsel %vm208, %v502, -inf
          %v517 = vmax.f32 %v513, %v516
          %v518 = vmax.f32 %v515, %v517
          %v519 = vsel %vm208, %v489, -inf
          %v520 = vsel %vm208, %v491, -inf
          %v521 = vsel %vm208, %v493, -inf
          %v522 = vmax.f32 %v519, %v521
          %v523 = vsel %vm208, %v495, -inf
          %v524 = vmax.f32 %v520, %v523
          %v525 = vsel %vm208, %v497, -inf
          %v526 = vmax.f32 %v522, %v525
          %v527 = vsel %vm208, %v499, -inf
          %v528 = vmax.f32 %v524, %v527
          %v529 = vsel %vm208, %v501, -inf
          %v530 = vmax.f32 %v526, %v529
          %v531 = vsel %vm208, %v503, -inf
          %v532 = vmax.f32 %v528, %v531
          %v533 = vmax.f32 %v530, %v532
          %s534 = scalar_lea.vmem [#allocation2], 32
          %v535 = vld [vmem:[%s534] sm:$0xff]
          %v536 = vld [vmem:[%s534 + $0x8] sm:$0xff]
          %v537 = vmax.f32 %v535, %v518
          %v538 = vmax.f32 %v536, %v533
          %539 = vst.msk [vmem:[%s534] sm:$0xff] %vm208, %v537
          %540 = vst.msk [vmem:[%s534 + $0x8] sm:$0xff] %vm208, %v538
          %v541 = vstv %s195
          %vm542 = vcmp.ge.s32.totalorder %v249, %v541
          %vm543 = vcmp.ge.s32.totalorder %v250, %v541
          %vm544 = vcmp.ge.s32.totalorder %v251, %v541
          %vm545 = vcmp.ge.s32.totalorder %v252, %v541
          %vm546 = vcmp.ge.s32.totalorder %v253, %v541
          %vm547 = vcmp.ge.s32.totalorder %v254, %v541
          %vm548 = vcmp.ge.s32.totalorder %v255, %v541
          %vm549 = vcmp.ge.s32.totalorder %v256, %v541
          %v550 = vstv %s199
          %vm551 = vcmp.lt.s32.totalorder %v249, %v550
          %vm552 = vcmp.lt.s32.totalorder %v250, %v550
          %vm553 = vcmp.lt.s32.totalorder %v251, %v550
          %vm554 = vcmp.lt.s32.totalorder %v252, %v550
          %vm555 = vcmp.lt.s32.totalorder %v253, %v550
          %vm556 = vcmp.lt.s32.totalorder %v254, %v550
          %vm557 = vcmp.lt.s32.totalorder %v255, %v550
          %vm558 = vcmp.lt.s32.totalorder %v256, %v550
          %vm559 = vmand %vm542, %vm551
          %vm560 = vmand %vm543, %vm552
          %vm561 = vmand %vm544, %vm553
          %vm562 = vmand %vm545, %vm554
          %vm563 = vmand %vm546, %vm555
          %vm564 = vmand %vm547, %vm556
          %vm565 = vmand %vm548, %vm557
          %vm566 = vmand %vm549, %vm558
          %v567 = vsel %vm559, 1, 0
          %v568 = vsel %vm560, 1, 0
          %v569 = vsel %vm561, 1, 0
          %v570 = vsel %vm562, 1, 0
          %v571 = vsel %vm563, 1, 0
          %v572 = vsel %vm564, 1, 0
          %v573 = vsel %vm565, 1, 0
          %v574 = vsel %vm566, 1, 0
          %vm575 = vcmp.eq.s32.totalorder %v567, 1
          %vm576 = vcmp.eq.s32.totalorder %v568, 1
          %vm577 = vcmp.eq.s32.totalorder %v569, 1
          %vm578 = vcmp.eq.s32.totalorder %v570, 1
          %vm579 = vcmp.eq.s32.totalorder %v571, 1
          %vm580 = vcmp.eq.s32.totalorder %v572, 1
          %vm581 = vcmp.eq.s32.totalorder %v573, 1
          %vm582 = vcmp.eq.s32.totalorder %v574, 1
          %v583 = vsel %vm575, %v233, -inf
          %v584 = vsel %vm575, %v234, -inf
          %v585 = vsel %vm576, %v235, -inf
          %v586 = vsel %vm576, %v236, -inf
          %v587 = vsel %vm577, %v237, -inf
          %v588 = vsel %vm577, %v238, -inf
          %v589 = vsel %vm578, %v239, -inf
          %v590 = vsel %vm578, %v240, -inf
          %v591 = vsel %vm579, %v241, -inf
          %v592 = vsel %vm579, %v242, -inf
          %v593 = vsel %vm580, %v243, -inf
          %v594 = vsel %vm580, %v244, -inf
          %v595 = vsel %vm581, %v245, -inf
          %v596 = vsel %vm581, %v246, -inf
          %v597 = vsel %vm582, %v247, -inf
          %v598 = vsel %vm582, %v248, -inf
          %v599 = vsel %vm208, %v583, -inf
          %v600 = vsel %vm208, %v585, -inf
          %v601 = vsel %vm208, %v587, -inf
          %v602 = vmax.f32 %v599, %v601
          %v603 = vsel %vm208, %v589, -inf
          %v604 = vmax.f32 %v600, %v603
          %v605 = vsel %vm208, %v591, -inf
          %v606 = vmax.f32 %v602, %v605
          %v607 = vsel %vm208, %v593, -inf
          %v608 = vmax.f32 %v604, %v607
          %v609 = vsel %vm208, %v595, -inf
          %v610 = vmax.f32 %v606, %v609
          %v611 = vsel %vm208, %v597, -inf
          %v612 = vmax.f32 %v608, %v611
          %v613 = vmax.f32 %v610, %v612
          %v614 = vsel %vm208, %v584, -inf
          %v615 = vsel %vm208, %v586, -inf
          %v616 = vsel %vm208, %v588, -inf
          %v617 = vmax.f32 %v614, %v616
          %v618 = vsel %vm208, %v590, -inf
          %v619 = vmax.f32 %v615, %v618
          %v620 = vsel %vm208, %v592, -inf
          %v621 = vmax.f32 %v617, %v620
          %v622 = vsel %vm208, %v594, -inf
          %v623 = vmax.f32 %v619, %v622
          %v624 = vsel %vm208, %v596, -inf
          %v625 = vmax.f32 %v621, %v624
          %v626 = vsel %vm208, %v598, -inf
          %v627 = vmax.f32 %v623, %v626
          %v628 = vmax.f32 %v625, %v627
          %s629 = scalar_lea.vmem [#allocation2], 48
          %v630 = vld [vmem:[%s629] sm:$0xff]
          %v631 = vld [vmem:[%s629 + $0x8] sm:$0xff]
          %v632 = vmax.f32 %v630, %v613
          %v633 = vmax.f32 %v631, %v628
          %634 = vst.msk [vmem:[%s629] sm:$0xff] %vm208, %v632
          %635 = vst.msk [vmem:[%s629 + $0x8] sm:$0xff] %vm208, %v633
        $region35: #{roi_pool.1} parent=28 // pred_fallthru
          _
      $region29: #{roi_pool.1} parent=23 // loop_footer
        %s222 = sadd.s32 1, %s218
      $region30: #{roi_pool.1} parent=23 // loop_footer_branch
        %217 = sbr.rel target = $region26
      $region31: #{roi_pool.1} parent=23 // loop_exit
        _
      %v636 = vlaneseq
      %v637 = vshrl.u32 %v636, 7
      %v638 = vadd.s32 %v637, 8
      %v639 = vld [vmem:[#allocation2] sm:$0xff]
      %v640 = vld [vmem:[#allocation2 + $0x8] sm:$0xff]
      %p641 = scmp.gt.s32.totalorder %s196, %s189
      %s642 = scalar_select %p641, 1, 0
      %v643 = vstv %s642
      %vm644 = vcmp.eq.s32.totalorder %v643, 1
      %v645 = vsel %vm644, %v639, 0.0
      %v646 = vsel %vm644, %v640, 0.0
      %v647 = vstv %s200
      %vm648 = vcmp.ge.s32.totalorder %v637, %v647
      %vm649 = vcmp.ge.s32.totalorder %v638, %v647
      %v650 = vstv %s204
      %vm651 = vcmp.lt.s32.totalorder %v637, %v650
      %vm652 = vcmp.lt.s32.totalorder %v638, %v650
      %vm653 = vmand %vm648, %vm651
      %vm654 = vmand %vm649, %vm652
      %v655 = vsel %vm653, 1, 0
      %v656 = vsel %vm654, 1, 0
      %vm657 = vcmp.eq.s32.totalorder %v655, 1
      %vm658 = vcmp.eq.s32.totalorder %v656, 1
      %v659 = vsel %vm657, %v645, -inf
      %v660 = vsel %vm658, %v646, -inf
      %v661 = vsel %vm208, %v659, -inf
      %v662 = vsel %vm208, %v660, -inf
      %v663 = vmax.f32 %v661, %v662
      %v664 = vrot.slane %v663, 4
      %v665 = vmax.f32 %v663, %v664
      %v666 = vrot.slane %v665, 2
      %v667 = vmax.f32 %v665, %v666
      %v668 = vrot.slane %v667, 1
      %v669 = vmax.f32 %v667, %v668
      %p670 = scmp.gt.s32.totalorder %s204, %s200
      %s671 = scalar_select %p670, 1, 0
      %v672 = vstv %s671
      %vm673 = vcmp.eq.s32.totalorder %v672, 1
      %v674 = vsel %vm673, %v669, 0.0
      %v675 = vstv %s201
      %vm676 = vcmp.ge.s32.totalorder %v637, %v675
      %vm677 = vcmp.ge.s32.totalorder %v638, %v675
      %v678 = vstv %s205
      %vm679 = vcmp.lt.s32.totalorder %v637, %v678
      %vm680 = vcmp.lt.s32.totalorder %v638, %v678
      %vm681 = vmand %vm676, %vm679
      %vm682 = vmand %vm677, %vm680
      %v683 = vsel %vm681, 1, 0
      %v684 = vsel %vm682, 1, 0
      %vm685 = vcmp.eq.s32.totalorder %v683, 1
      %vm686 = vcmp.eq.s32.totalorder %v684, 1
      %v687 = vsel %vm685, %v645, -inf
      %v688 = vsel %vm686, %v646, -inf
      %v689 = vsel %vm208, %v687, -inf
      %v690 = vsel %vm208, %v688, -inf
      %v691 = vmax.f32 %v689, %v690
      %v692 = vrot.slane %v691, 4
      %v693 = vmax.f32 %v691, %v692
      %v694 = vrot.slane %v693, 2
      %v695 = vmax.f32 %v693, %v694
      %v696 = vrot.slane %v695, 1
      %v697 = vmax.f32 %v695, %v696
      %p698 = scmp.gt.s32.totalorder %s205, %s201
      %s699 = scalar_select %p698, 1, 0
      %v700 = vstv %s699
      %vm701 = vcmp.eq.s32.totalorder %v700, 1
      %v702 = vsel %vm701, %v697, 0.0
      %v703 = vstv %s202
      %vm704 = vcmp.ge.s32.totalorder %v637, %v703
      %vm705 = vcmp.ge.s32.totalorder %v638, %v703
      %v706 = vstv %s206
      %vm707 = vcmp.lt.s32.totalorder %v637, %v706
      %vm708 = vcmp.lt.s32.totalorder %v638, %v706
      %vm709 = vmand %vm704, %vm707
      %vm710 = vmand %vm705, %vm708
      %v711 = vsel %vm709, 1, 0
      %v712 = vsel %vm710, 1, 0
      %vm713 = vcmp.eq.s32.totalorder %v711, 1
      %vm714 = vcmp.eq.s32.totalorder %v712, 1
      %v715 = vsel %vm713, %v645, -inf
      %v716 = vsel %vm714, %v646, -inf
      %v717 = vsel %vm208, %v715, -inf
      %v718 = vsel %vm208, %v716, -inf
      %v719 = vmax.f32 %v717, %v718
      %v720 = vrot.slane %v719, 4
      %v721 = vmax.f32 %v719, %v720
      %v722 = vrot.slane %v721, 2
      %v723 = vmax.f32 %v721, %v722
      %v724 = vrot.slane %v723, 1
      %v725 = vmax.f32 %v723, %v724
      %p726 = scmp.gt.s32.totalorder %s206, %s202
      %s727 = scalar_select %p726, 1, 0
      %v728 = vstv %s727
      %vm729 = vcmp.eq.s32.totalorder %v728, 1
      %v730 = vsel %vm729, %v725, 0.0
      %v731 = vstv %s203
      %vm732 = vcmp.ge.s32.totalorder %v637, %v731
      %vm733 = vcmp.ge.s32.totalorder %v638, %v731
      %v734 = vstv %s207
      %vm735 = vcmp.lt.s32.totalorder %v637, %v734
      %vm736 = vcmp.lt.s32.totalorder %v638, %v734
      %vm737 = vmand %vm732, %vm735
      %vm738 = vmand %vm733, %vm736
      %v739 = vsel %vm737, 1, 0
      %v740 = vsel %vm738, 1, 0
      %vm741 = vcmp.eq.s32.totalorder %v739, 1
      %vm742 = vcmp.eq.s32.totalorder %v740, 1
      %v743 = vsel %vm741, %v645, -inf
      %v744 = vsel %vm742, %v646, -inf
      %v745 = vsel %vm208, %v743, -inf
      %v746 = vsel %vm208, %v744, -inf
      %v747 = vmax.f32 %v745, %v746
      %v748 = vrot.slane %v747, 4
      %v749 = vmax.f32 %v747, %v748
      %v750 = vrot.slane %v749, 2
      %v751 = vmax.f32 %v749, %v750
      %v752 = vrot.slane %v751, 1
      %v753 = vmax.f32 %v751, %v752
      %p754 = scmp.gt.s32.totalorder %s207, %s203
      %s755 = scalar_select %p754, 1, 0
      %v756 = vstv %s755
      %vm757 = vcmp.eq.s32.totalorder %v756, 1
      %v758 = vsel %vm757, %v753, 0.0
      %s759 = scalar_lea.vmem [#allocation2], 16
      %v760 = vld [vmem:[%s759] sm:$0xff]
      %v761 = vld [vmem:[%s759 + $0x8] sm:$0xff]
      %p762 = scmp.gt.s32.totalorder %s197, %s191
      %s763 = scalar_select %p762, 1, 0
      %v764 = vstv %s763
      %vm765 = vcmp.eq.s32.totalorder %v764, 1
      %v766 = vsel %vm765, %v760, 0.0
      %v767 = vsel %vm765, %v761, 0.0
      %v768 = vsel %vm657, %v766, -inf
      %v769 = vsel %vm658, %v767, -inf
      %v770 = vsel %vm208, %v768, -inf
      %v771 = vsel %vm208, %v769, -inf
      %v772 = vmax.f32 %v770, %v771
      %v773 = vrot.slane %v772, 4
      %v774 = vmax.f32 %v772, %v773
      %v775 = vrot.slane %v774, 2
      %v776 = vmax.f32 %v774, %v775
      %v777 = vrot.slane %v776, 1
      %v778 = vmax.f32 %v776, %v777
      %v779 = vsel %vm673, %v778, 0.0
      %v780 = vsel %vm685, %v766, -inf
      %v781 = vsel %vm686, %v767, -inf
      %v782 = vsel %vm208, %v780, -inf
      %v783 = vsel %vm208, %v781, -inf
      %v784 = vmax.f32 %v782, %v783
      %v785 = vrot.slane %v784, 4
      %v786 = vmax.f32 %v784, %v785
      %v787 = vrot.slane %v786, 2
      %v788 = vmax.f32 %v786, %v787
      %v789 = vrot.slane %v788, 1
      %v790 = vmax.f32 %v788, %v789
      %v791 = vsel %vm701, %v790, 0.0
      %v792 = vsel %vm713, %v766, -inf
      %v793 = vsel %vm714, %v767, -inf
      %v794 = vsel %vm208, %v792, -inf
      %v795 = vsel %vm208, %v793, -inf
      %v796 = vmax.f32 %v794, %v795
      %v797 = vrot.slane %v796, 4
      %v798 = vmax.f32 %v796, %v797
      %v799 = vrot.slane %v798, 2
      %v800 = vmax.f32 %v798, %v799
      %v801 = vrot.slane %v800, 1
      %v802 = vmax.f32 %v800, %v801
      %v803 = vsel %vm729, %v802, 0.0
      %v804 = vsel %vm741, %v766, -inf
      %v805 = vsel %vm742, %v767, -inf
      %v806 = vsel %vm208, %v804, -inf
      %v807 = vsel %vm208, %v805, -inf
      %v808 = vmax.f32 %v806, %v807
      %v809 = vrot.slane %v808, 4
      %v810 = vmax.f32 %v808, %v809
      %v811 = vrot.slane %v810, 2
      %v812 = vmax.f32 %v810, %v811
      %v813 = vrot.slane %v812, 1
      %v814 = vmax.f32 %v812, %v813
      %v815 = vsel %vm757, %v814, 0.0
      %s816 = scalar_lea.vmem [#allocation2], 32
      %v817 = vld [vmem:[%s816] sm:$0xff]
      %v818 = vld [vmem:[%s816 + $0x8] sm:$0xff]
      %p819 = scmp.gt.s32.totalorder %s198, %s193
      %s820 = scalar_select %p819, 1, 0
      %v821 = vstv %s820
      %vm822 = vcmp.eq.s32.totalorder %v821, 1
      %v823 = vsel %vm822, %v817, 0.0
      %v824 = vsel %vm822, %v818, 0.0
      %v825 = vsel %vm657, %v823, -inf
      %v826 = vsel %vm658, %v824, -inf
      %v827 = vsel %vm208, %v825, -inf
      %v828 = vsel %vm208, %v826, -inf
      %v829 = vmax.f32 %v827, %v828
      %v830 = vrot.slane %v829, 4
      %v831 = vmax.f32 %v829, %v830
      %v832 = vrot.slane %v831, 2
      %v833 = vmax.f32 %v831, %v832
      %v834 = vrot.slane %v833, 1
      %v835 = vmax.f32 %v833, %v834
      %v836 = vsel %vm673, %v835, 0.0
      %v837 = vsel %vm685, %v823, -inf
      %v838 = vsel %vm686, %v824, -inf
      %v839 = vsel %vm208, %v837, -inf
      %v840 = vsel %vm208, %v838, -inf
      %v841 = vmax.f32 %v839, %v840
      %v842 = vrot.slane %v841, 4
      %v843 = vmax.f32 %v841, %v842
      %v844 = vrot.slane %v843, 2
      %v845 = vmax.f32 %v843, %v844
      %v846 = vrot.slane %v845, 1
      %v847 = vmax.f32 %v845, %v846
      %v848 = vsel %vm701, %v847, 0.0
      %v849 = vsel %vm713, %v823, -inf
      %v850 = vsel %vm714, %v824, -inf
      %v851 = vsel %vm208, %v849, -inf
      %v852 = vsel %vm208, %v850, -inf
      %v853 = vmax.f32 %v851, %v852
      %v854 = vrot.slane %v853, 4
      %v855 = vmax.f32 %v853, %v854
      %v856 = vrot.slane %v855, 2
      %v857 = vmax.f32 %v855, %v856
      %v858 = vrot.slane %v857, 1
      %v859 = vmax.f32 %v857, %v858
      %v860 = vsel %vm729, %v859, 0.0
      %v861 = vsel %vm741, %v823, -inf
      %v862 = vsel %vm742, %v824, -inf
      %v863 = vsel %vm208, %v861, -inf
      %v864 = vsel %vm208, %v862, -inf
      %v865 = vmax.f32 %v863, %v864
      %v866 = vrot.slane %v865, 4
      %v867 = vmax.f32 %v865, %v866
      %v868 = vrot.slane %v867, 2
      %v869 = vmax.f32 %v867, %v868
      %v870 = vrot.slane %v869, 1
      %v871 = vmax.f32 %v869, %v870
      %v872 = vsel %vm757, %v871, 0.0
      %s873 = scalar_lea.vmem [#allocation2], 48
      %v874 = vld [vmem:[%s873] sm:$0xff]
      %v875 = vld [vmem:[%s873 + $0x8] sm:$0xff]
      %p876 = scmp.gt.s32.totalorder %s199, %s195
      %s877 = scalar_select %p876, 1, 0
      %v878 = vstv %s877
      %vm879 = vcmp.eq.s32.totalorder %v878, 1
      %v880 = vsel %vm879, %v874, 0.0
      %v881 = vsel %vm879, %v875, 0.0
      %v882 = vsel %vm657, %v880, -inf
      %v883 = vsel %vm658, %v881, -inf
      %v884 = vsel %vm208, %v882, -inf
      %v885 = vsel %vm208, %v883, -inf
      %v886 = vmax.f32 %v884, %v885
      %v887 = vrot.slane %v886, 4
      %v888 = vmax.f32 %v886, %v887
      %v889 = vrot.slane %v888, 2
      %v890 = vmax.f32 %v888, %v889
      %v891 = vrot.slane %v890, 1
      %v892 = vmax.f32 %v890, %v891
      %v893 = vsel %vm673, %v892, 0.0
      %v894 = vsel %vm685, %v880, -inf
      %v895 = vsel %vm686, %v881, -inf
      %v896 = vsel %vm208, %v894, -inf
      %v897 = vsel %vm208, %v895, -inf
      %v898 = vmax.f32 %v896, %v897
      %v899 = vrot.slane %v898, 4
      %v900 = vmax.f32 %v898, %v899
      %v901 = vrot.slane %v900, 2
      %v902 = vmax.f32 %v900, %v901
      %v903 = vrot.slane %v902, 1
      %v904 = vmax.f32 %v902, %v903
      %v905 = vsel %vm701, %v904, 0.0
      %v906 = vsel %vm713, %v880, -inf
      %v907 = vsel %vm714, %v881, -inf
      %v908 = vsel %vm208, %v906, -inf
      %v909 = vsel %vm208, %v907, -inf
      %v910 = vmax.f32 %v908, %v909
      %v911 = vrot.slane %v910, 4
      %v912 = vmax.f32 %v910, %v911
      %v913 = vrot.slane %v912, 2
      %v914 = vmax.f32 %v912, %v913
      %v915 = vrot.slane %v914, 1
      %v916 = vmax.f32 %v914, %v915
      %v917 = vsel %vm729, %v916, 0.0
      %v918 = vsel %vm741, %v880, -inf
      %v919 = vsel %vm742, %v881, -inf
      %v920 = vsel %vm208, %v918, -inf
      %v921 = vsel %vm208, %v919, -inf
      %v922 = vmax.f32 %v920, %v921
      %v923 = vrot.slane %v922, 4
      %v924 = vmax.f32 %v922, %v923
      %v925 = vrot.slane %v924, 2
      %v926 = vmax.f32 %v924, %v925
      %v927 = vrot.slane %v926, 1
      %v928 = vmax.f32 %v926, %v927
      %v929 = vsel %vm757, %v928, 0.0
      %vm930 = vcmask 1040384
      %v931 = vsel %vm930, %v674, %v702
      %vm932 = vcmask 1041408
      %v933 = vsel %vm932, %v931, %v730
      %vm934 = vcmask 1042432
      %v935 = vsel %vm934, %v933, %v758
      %vm936 = vcmask 1043456
      %v937 = vsel %vm936, %v935, %v779
      %vm938 = vcmask 1044480
      %v939 = vsel %vm938, %v937, %v791
      %vm940 = vcmask 1045504
      %v941 = vsel %vm940, %v939, %v803
      %vm942 = vcmask 1046528
      %v943 = vsel %vm942, %v941, %v815
      %v944 = vsel %vm930, %v836, %v848
      %v945 = vsel %vm932, %v944, %v860
      %v946 = vsel %vm934, %v945, %v872
      %v947 = vsel %vm936, %v946, %v893
      %v948 = vsel %vm938, %v947, %v905
      %v949 = vsel %vm940, %v948, %v917
      %v950 = vsel %vm942, %v949, %v929
      %951 = vst.msk [vmem:[%s187] sm:$0xff] %vm208, %v943
      %952 = vst.msk [vmem:[%s187 + $0x8] sm:$0xff] %vm208, %v950
      %p953 = scmp.lt.s32.totalorder %s50, 5
      %s954 = scalar_select %p953, %s50, 5
      %p955 = scmp.lt.s32.totalorder %s49, 0
      %s956 = scalar_select %p955, %s49, 0
      %s957 = smul.addr %s954, 2
      %s958 = sadd.s32 %s956, %s957
      %s959 = smul.addr %s958, 8
      %s960 = scalar_lea.vmem %s6, %s959
      // Predicated region
      $region36: #{roi_pool.1} parent=23 // pred_check
        %p961 = pneg %p107
      $region37: #{roi_pool.1} parent=23 // pred_check_branch
        %963 = sbr.rel (%p961) target = $region39
      $region38: #{roi_pool.1} parent=23 // pred_region
        _
      $region39: #{roi_pool.1} parent=23 // pred_fallthru
        _
    $region24: #{roi_pool.1} parent=5 // pred_fallthru
      _
    %p964 = scmp.le.s32.totalorder 2, %s40
    // Predicated region
    $region40: #{roi_pool.1} parent=5 // pred_check
      %p965 = pneg %p964
    $region41: #{roi_pool.1} parent=5 // pred_check_branch
      %967 = sbr.rel (%p965) target = $region43
    $region42: #{roi_pool.1} parent=5 // pred_region
      %s968 = ssub.s32 %s40, 2
      // Predicated region
      $region44: #{roi_pool.1} parent=42 // pred_check
        %p969 = pneg %p113
      $region45: #{roi_pool.1} parent=42 // pred_check_branch
        %971 = sbr.rel (%p969) target = $region47
      $region46: #{roi_pool.1} parent=42 // pred_region
        %p972 = scmp.lt.s32.totalorder %s52, 5
        %s973 = scalar_select %p972, %s52, 5
        %p974 = scmp.lt.s32.totalorder %s51, 0
        %s975 = scalar_select %p974, %s51, 0
        %s976 = smul.addr %s973, 2
        %s977 = sadd.s32 %s975, %s976
        %s978 = smul.addr %s977, 8
        %s979 = scalar_lea.vmem %s6, %s978
      $region47: #{roi_pool.1} parent=42 // pred_fallthru
        _
    $region43: #{roi_pool.1} parent=5 // pred_fallthru
      _
  $region6: #{roi_pool.1} parent=0 // loop_footer
    %s44 = sadd.s32 1, %s40
  $region7: #{roi_pool.1} parent=0 // loop_footer_branch
    %39 = sbr.rel target = $region3
  $region8: #{roi_pool.1} parent=0 // loop_exit
    _

</llo_original>
